<compile_context>
chip_gen: v7x
topology: tpu7x:2x2x1
jax: 0.10.0
libtpu: 0.0.40
codegen_flags: <defaults>
</compile_context>

<pallas_src>
import functools

import jax
import jax.numpy as jnp
from jax.experimental import pallas as pl
from jax.experimental.pallas import tpu as pltpu

BN_EPS = 1e-5


def _round_up(a, b):
    return (a + b - 1) // b * b


# ---------------------------------------------------------------------------
# Fused kernel: (DSConv -> BN -> ReLU) x 2, whole batch in one step.
# ---------------------------------------------------------------------------
def _double_ds_conv_kernel(x_ref, mask_ref,
                           w1_ref, b1_ref, g1_ref, be1_ref,
                           w2_ref, b2_ref, g2_ref, be2_ref,
                           o_ref,
                           pad_ref, win1_ref, win2_ref,
                           *, Wp, N, count, eps):
    """Layout: channels on sublanes; the batch's zero-padded spatial maps are
    flattened row-major (row stride Wp) and concatenated on the lane axis with a
    per-batch stride that is a multiple of 128.  The image interior lives at lane
    offset 128 of the padded buffers, so the 9 conv taps are plain static lane
    windows and one (Cout, 9*Cin) @ (9*Cin, N) matmul evaluates the folded conv."""
    mask = mask_ref[...]                                    # (1, N) valid-pixel mask
    inv_count = 1.0 / count
    offs = [(dy - 1) * Wp + (dx - 1) for dy in range(3) for dx in range(3)]

    # ---------------- Block 1: folded depthwise+pointwise 3x3 conv ----------------
    cin = x_ref.shape[0]
    for k, off in enumerate(offs):                          # stack 9 shifted windows
        win1_ref[k * cin:(k + 1) * cin, :] = x_ref[:, 128 + off:128 + off + N]
    y1 = jnp.dot(w1_ref[...], win1_ref[...],
                 preferred_element_type=jnp.float32) + b1_ref[...]   # (Cout, N)

    # BatchNorm-1 (training mode, global batch stats, centered two-pass variance)
    mu1 = jnp.sum(y1 * mask, axis=1, keepdims=True) * inv_count       # (Cout, 1)
    d1 = (y1 - mu1) * mask
    var1 = jnp.sum(d1 * d1, axis=1, keepdims=True) * inv_count
    scale1 = g1_ref[...] * jax.lax.rsqrt(var1 + eps)
    shift1 = be1_ref[...] - mu1 * scale1
    a1 = jnp.maximum(y1 * scale1 + shift1, 0.0) * mask      # BN+ReLU, re-zero pad cols

    # ---------------- Block 2: folded depthwise+pointwise 3x3 conv ----------------
    cmid = a1.shape[0]
    pad_ref[:, :128] = jnp.zeros((cmid, 128), jnp.float32)            # head padding
    pad_ref[:, 128 + N:] = jnp.zeros((cmid, pad_ref.shape[1] - 128 - N), jnp.float32)
    pad_ref[:, 128:128 + N] = a1                                      # 128-aligned store
    for k, off in enumerate(offs):
        win2_ref[k * cmid:(k + 1) * cmid, :] = pad_ref[:, 128 + off:128 + off + N]
    y2 = jnp.dot(w2_ref[...], win2_ref[...],
                 preferred_element_type=jnp.float32) + b2_ref[...]    # (Cout, N)

    # BatchNorm-2 + ReLU (junk/gap lanes are stripped in the wrapper)
    mu2 = jnp.sum(y2 * mask, axis=1, keepdims=True) * inv_count
    d2 = (y2 - mu2) * mask
    var2 = jnp.sum(d2 * d2, axis=1, keepdims=True) * inv_count
    scale2 = g2_ref[...] * jax.lax.rsqrt(var2 + eps)
    shift2 = be2_ref[...] - mu2 * scale2
    o_ref[...] = jnp.maximum(y2 * scale2 + shift2, 0.0)


# ---------------------------------------------------------------------------
# Parameter folding
# ---------------------------------------------------------------------------
def _fold_dsconv_weights(dw, dwb, pw, pwb, cin_pad, cout_pad):
    """Fold depthwise(3x3, groups=Cin) + pointwise(1x1) into one full 3x3 conv,
    laid out as (Cout_pad, 9*Cin_pad) matching the sublane-stacked window order."""
    cin = dw.shape[0]
    cout = pw.shape[0]
    dw = jnp.pad(dw[:, 0].astype(jnp.float32),
                 ((0, cin_pad - cin), (0, 0), (0, 0)))                # (Cin_p, 3, 3)
    dwb = jnp.pad(dwb.astype(jnp.float32), ((0, cin_pad - cin),))     # (Cin_p,)
    pw = jnp.pad(pw[:, :, 0, 0].astype(jnp.float32),
                 ((0, cout_pad - cout), (0, cin_pad - cin)))          # (Cout_p, Cin_p)
    pwb = jnp.pad(pwb.astype(jnp.float32), ((0, cout_pad - cout),))   # (Cout_p,)
    # w[o, k*Cin_p + i] = pw[o, i] * dw[i, ky, kx],  k = ky*3 + kx  (exact fold)
    w = jnp.einsum('oi,iyx->oyxi', pw, dw).reshape(cout_pad, 9 * cin_pad)
    bias = (pw * dwb[None, :]).sum(axis=1) + pwb
    return w, bias.reshape(cout_pad, 1)


def _pad_col(v, cpad):
    v = v.astype(jnp.float32)
    return jnp.pad(v, ((0, cpad - v.shape[0]),)).reshape(cpad, 1)


# ---------------------------------------------------------------------------
# Forward pass
# ---------------------------------------------------------------------------
def double_ds_conv(x, params, eps=BN_EPS):
    """Forward pass of DoubleDSConv (training-mode BatchNorm, batch statistics)."""
    B, cin, H, W = x.shape
    (dw1, dwb1, pw1, pwb1, g1, be1,
     dw2, dwb2, pw2, pwb2, g2, be2) = params
    cout = pw1.shape[0]

    c8in = _round_up(cin, 8)
    c8out = _round_up(cout, 8)
    Wp = W + 2                                   # 2 zero junk cols = left/right pad
    HWp = H * Wp
    PB = _round_up(HWp + Wp + 1, 128)            # per-batch lane stride (gap >= Wp+1)
    N = B * PB                                   # matmul N dim, multiple of 128
    L = N + 256                                  # padded-map length (128 head + tail)
    count = float(B * H * W)

    w1, bias1 = _fold_dsconv_weights(dw1, dwb1, pw1, pwb1, c8in, c8out)
    w2, bias2 = _fold_dsconv_weights(dw2, dwb2, pw2, pwb2, c8out, c8out)
    g1p, be1p = _pad_col(g1, c8out), _pad_col(be1, c8out)
    g2p, be2p = _pad_col(g2, c8out), _pad_col(be2, c8out)

    # Build the flat, zero-padded, batch-concatenated input map (Cin_p, L):
    # image interior at lane 128, row stride Wp, per-batch stride PB.
    xf = jnp.pad(x.astype(jnp.float32),
                 ((0, 0), (0, c8in - cin), (0, 0), (0, Wp - W)))      # (B, C, H, Wp)
    xf = jnp.pad(xf.reshape(B, c8in, HWp), ((0, 0), (0, 0), (0, PB - HWp)))
    xf = jnp.transpose(xf, (1, 0, 2)).reshape(c8in, N)
    x_flat = jnp.pad(xf, ((0, 0), (128, L - 128 - N)))                # (C_p, L)

    # Valid-pixel mask over the N output lanes.
    p = jnp.arange(N) % PB
    mask = ((p < HWp) & (p % Wp < W)).astype(jnp.float32).reshape(1, N)

    kern = functools.partial(_double_ds_conv_kernel,
                             Wp=Wp, N=N, count=count, eps=eps)
    out_flat = pl.pallas_call(
        kern,
        out_shape=jax.ShapeDtypeStruct((c8out, N), jnp.float32),
        grid=(1,),
        in_specs=[
            pl.BlockSpec((c8in, L), lambda i: (0, 0)),            # padded input map
            pl.BlockSpec((1, N), lambda i: (0, 0)),               # valid-pixel mask
            pl.BlockSpec((c8out, 9 * c8in), lambda i: (0, 0)),    # folded conv-1 W
            pl.BlockSpec((c8out, 1), lambda i: (0, 0)),           # folded conv-1 bias
            pl.BlockSpec((c8out, 1), lambda i: (0, 0)),           # BN1 gamma
            pl.BlockSpec((c8out, 1), lambda i: (0, 0)),           # BN1 beta
            pl.BlockSpec((c8out, 9 * c8out), lambda i: (0, 0)),   # folded conv-2 W
            pl.BlockSpec((c8out, 1), lambda i: (0, 0)),           # folded conv-2 bias
            pl.BlockSpec((c8out, 1), lambda i: (0, 0)),           # BN2 gamma
            pl.BlockSpec((c8out, 1), lambda i: (0, 0)),           # BN2 beta
        ],
        out_specs=pl.BlockSpec((c8out, N), lambda i: (0, 0)),
        scratch_shapes=[
            pltpu.VMEM((c8out, L), jnp.float32),        # padded map for block 2
            pltpu.VMEM((9 * c8in, N), jnp.float32),     # stacked windows, block 1
            pltpu.VMEM((9 * c8out, N), jnp.float32),    # stacked windows, block 2
        ],
        compiler_params=pltpu.CompilerParams(
            dimension_semantics=("arbitrary",),
            vmem_limit_bytes=32 * 1024 * 1024),
    )(x_flat, mask, w1, bias1, g1p, be1p, w2, bias2, g2p, be2p)

    # Strip gap lanes / junk columns / padded channels, back to NCHW.
    out = out_flat.reshape(c8out, B, PB)[:, :, :HWp].reshape(c8out, B, H, Wp)
    return jnp.transpose(out, (1, 0, 2, 3))[:, :cout, :, :W]


# ---------------------------------------------------------------------------
# Pure-JAX reference (mirrors the PyTorch module)
# ---------------------------------------------------------------------------
def _torch_conv2d(x, w, b, padding, groups=1):
    y = jax.lax.conv_general_dilated(
        x, w, window_strides=(1, 1),
        padding=[(padding, padding), (padding, padding)],
        dimension_numbers=("NCHW", "OIHW", "NCHW"),
        feature_group_count=groups,
        precision=jax.lax.Precision.HIGHEST)
    return y + b.reshape(1, -1, 1, 1)


def _bn_train(x, gamma, beta, eps):
    mu = jnp.mean(x, axis=(0, 2, 3), keepdims=True)
    var = jnp.mean((x - mu) ** 2, axis=(0, 2, 3), keepdims=True)
    return ((x - mu) * jax.lax.rsqrt(var + eps) * gamma.reshape(1, -1, 1, 1)
            + beta.reshape(1, -1, 1, 1))


def reference(x, params, eps=BN_EPS):
    (dw1, dwb1, pw1, pwb1, g1, be1,
     dw2, dwb2, pw2, pwb2, g2, be2) = params
    cin = x.shape[1]
    cout = pw1.shape[0]
    h = _torch_conv2d(x, dw1, dwb1, padding=1, groups=cin)    # depthwise 1
    h = _torch_conv2d(h, pw1, pwb1, padding=0)                # pointwise 1
    h = jax.nn.relu(_bn_train(h, g1, be1, eps))
    h = _torch_conv2d(h, dw2, dwb2, padding=1, groups=cout)   # depthwise 2
    h = _torch_conv2d(h, pw2, pwb2, padding=0)                # pointwise 2
    h = jax.nn.relu(_bn_train(h, g2, be2, eps))
    return h


if __name__ == "__main__":
    key = jax.random.PRNGKey(0)
    ks = jax.random.split(key, 13)
    B, Cin, Cout, H, W = 2, 4, 8, 16, 16

    def rnd(k, shape, scale=0.3):
        return scale * jax.random.normal(k, shape, dtype=jnp.float32)

    params = (
        rnd(ks[1], (Cin, 1, 3, 3)),             # depthwise-1 weight (groups=Cin)
        rnd(ks[2], (Cin,)),                     # depthwise-1 bias
        rnd(ks[3], (Cout, Cin, 1, 1)),          # pointwise-1 weight
        rnd(ks[4], (Cout,)),                    # pointwise-1 bias
        1.0 + rnd(ks[5], (Cout,), 0.1),         # BN1 gamma
        rnd(ks[6], (Cout,), 0.1),               # BN1 beta
        rnd(ks[7], (Cout, 1, 3, 3)),            # depthwise-2 weight (groups=Cout)
        rnd(ks[8], (Cout,)),                    # depthwise-2 bias
        rnd(ks[9], (Cout, Cout, 1, 1)),         # pointwise-2 weight
        rnd(ks[10], (Cout,)),                   # pointwise-2 bias
        1.0 + rnd(ks[11], (Cout,), 0.1),        # BN2 gamma
        rnd(ks[12], (Cout,), 0.1),              # BN2 beta
    )
    x = jax.random.normal(ks[0], (B, Cin, H, W), dtype=jnp.float32)

    out = jax.block_until_ready(jax.jit(double_ds_conv)(x, params))
    ref = jax.block_until_ready(reference(x, params))

    assert out.shape == (B, Cout, H, W)
    max_err = float(jnp.max(jnp.abs(out - ref)))
    assert jnp.allclose(out, ref, rtol=3e-3, atol=3e-3), (
        f"mismatch vs JAX reference, max_err={max_err}")
    print("KERNEL_OK")
</pallas_src>

<mosaic_0001>
module attributes {stable_mosaic.version = 11 : i64} {
  func.func @_double_ds_conv_kernel(%arg0: i32, %arg1: memref<8x1024xf32, #tpu.memory_space<vmem>>, %arg2: memref<1x768xf32, #tpu.memory_space<vmem>>, %arg3: memref<8x72xf32, #tpu.memory_space<vmem>>, %arg4: memref<8x1xf32, #tpu.memory_space<vmem>>, %arg5: memref<8x1xf32, #tpu.memory_space<vmem>>, %arg6: memref<8x1xf32, #tpu.memory_space<vmem>>, %arg7: memref<8x72xf32, #tpu.memory_space<vmem>>, %arg8: memref<8x1xf32, #tpu.memory_space<vmem>>, %arg9: memref<8x1xf32, #tpu.memory_space<vmem>>, %arg10: memref<8x1xf32, #tpu.memory_space<vmem>>, %arg11: memref<8x768xf32, #tpu.memory_space<vmem>>, %arg12: memref<8x1024xf32, #tpu.memory_space<vmem>>, %arg13: memref<72x768xf32, #tpu.memory_space<vmem>>, %arg14: memref<72x768xf32, #tpu.memory_space<vmem>>) attributes {dimension_semantics = [#tpu.dimension_semantics<arbitrary>], iteration_bounds = array<i64: 1>, scalar_prefetch = 0 : i64, scratch_operands = 3 : i64, tpu.core_type = #tpu.core_type<tc>, window_params = [{pipeline_mode = #tpu.pipeline_mode<synchronous>, transform_indices = @transform_0, window_bounds = array<i64: 8, 1024>}, {pipeline_mode = #tpu.pipeline_mode<synchronous>, transform_indices = @transform_1, window_bounds = array<i64: 1, 768>}, {pipeline_mode = #tpu.pipeline_mode<synchronous>, transform_indices = @transform_2, window_bounds = array<i64: 8, 72>}, {pipeline_mode = #tpu.pipeline_mode<synchronous>, transform_indices = @transform_3, window_bounds = array<i64: 8, 1>}, {pipeline_mode = #tpu.pipeline_mode<synchronous>, transform_indices = @transform_4, window_bounds = array<i64: 8, 1>}, {pipeline_mode = #tpu.pipeline_mode<synchronous>, transform_indices = @transform_5, window_bounds = array<i64: 8, 1>}, {pipeline_mode = #tpu.pipeline_mode<synchronous>, transform_indices = @transform_6, window_bounds = array<i64: 8, 72>}, {pipeline_mode = #tpu.pipeline_mode<synchronous>, transform_indices = @transform_7, window_bounds = array<i64: 8, 1>}, {pipeline_mode = #tpu.pipeline_mode<synchronous>, transform_indices = @transform_8, window_bounds = array<i64: 8, 1>}, {pipeline_mode = #tpu.pipeline_mode<synchronous>, transform_indices = @transform_9, window_bounds = array<i64: 8, 1>}, {pipeline_mode = #tpu.pipeline_mode<synchronous>, transform_indices = @transform_10, window_bounds = array<i64: 8, 768>}]} {
    %c0 = arith.constant 0 : index
    %c0_0 = arith.constant 0 : index
    %0 = vector.load %arg2[%c0, %c0_0] : memref<1x768xf32, #tpu.memory_space<vmem>>, vector<1x768xf32>
    %c0_1 = arith.constant 0 : index
    %c109 = arith.constant 109 : index
    %1 = vector.load %arg1[%c0_1, %c109] : memref<8x1024xf32, #tpu.memory_space<vmem>>, vector<8x768xf32>
    %c0_2 = arith.constant 0 : index
    %c0_3 = arith.constant 0 : index
    %2 = vector.load %arg13[%c0_2, %c0_3] : memref<72x768xf32, #tpu.memory_space<vmem>>, vector<8x768xf32>
    tpu.vector_store %arg13[%c0_2, %c0_3], %1 {strides = array<i32>} : memref<72x768xf32, #tpu.memory_space<vmem>>, vector<8x768xf32>,
    %c0_4 = arith.constant 0 : index
    %c110 = arith.constant 110 : index
    %3 = vector.load %arg1[%c0_4, %c110] : memref<8x1024xf32, #tpu.memory_space<vmem>>, vector<8x768xf32>
    %c8 = arith.constant 8 : index
    %c0_5 = arith.constant 0 : index
    %4 = vector.load %arg13[%c8, %c0_5] : memref<72x768xf32, #tpu.memory_space<vmem>>, vector<8x768xf32>
    tpu.vector_store %arg13[%c8, %c0_5], %3 {strides = array<i32>} : memref<72x768xf32, #tpu.memory_space<vmem>>, vector<8x768xf32>,
    %c0_6 = arith.constant 0 : index
    %c111 = arith.constant 111 : index
    %5 = vector.load %arg1[%c0_6, %c111] : memref<8x1024xf32, #tpu.memory_space<vmem>>, vector<8x768xf32>
    %c16 = arith.constant 16 : index
    %c0_7 = arith.constant 0 : index
    %6 = vector.load %arg13[%c16, %c0_7] : memref<72x768xf32, #tpu.memory_space<vmem>>, vector<8x768xf32>
    tpu.vector_store %arg13[%c16, %c0_7], %5 {strides = array<i32>} : memref<72x768xf32, #tpu.memory_space<vmem>>, vector<8x768xf32>,
    %c0_8 = arith.constant 0 : index
    %c127 = arith.constant 127 : index
    %7 = vector.load %arg1[%c0_8, %c127] : memref<8x1024xf32, #tpu.memory_space<vmem>>, vector<8x768xf32>
    %c24 = arith.constant 24 : index
    %c0_9 = arith.constant 0 : index
    %8 = vector.load %arg13[%c24, %c0_9] : memref<72x768xf32, #tpu.memory_space<vmem>>, vector<8x768xf32>
    tpu.vector_store %arg13[%c24, %c0_9], %7 {strides = array<i32>} : memref<72x768xf32, #tpu.memory_space<vmem>>, vector<8x768xf32>,
    %c0_10 = arith.constant 0 : index
    %c128 = arith.constant 128 : index
    %9 = vector.load %arg1[%c0_10, %c128] : memref<8x1024xf32, #tpu.memory_space<vmem>>, vector<8x768xf32>
    %c32 = arith.constant 32 : index
    %c0_11 = arith.constant 0 : index
    %10 = vector.load %arg13[%c32, %c0_11] : memref<72x768xf32, #tpu.memory_space<vmem>>, vector<8x768xf32>
    tpu.vector_store %arg13[%c32, %c0_11], %9 {strides = array<i32>} : memref<72x768xf32, #tpu.memory_space<vmem>>, vector<8x768xf32>,
    %c0_12 = arith.constant 0 : index
    %c129 = arith.constant 129 : index
    %11 = vector.load %arg1[%c0_12, %c129] : memref<8x1024xf32, #tpu.memory_space<vmem>>, vector<8x768xf32>
    %c40 = arith.constant 40 : index
    %c0_13 = arith.constant 0 : index
    %12 = vector.load %arg13[%c40, %c0_13] : memref<72x768xf32, #tpu.memory_space<vmem>>, vector<8x768xf32>
    tpu.vector_store %arg13[%c40, %c0_13], %11 {strides = array<i32>} : memref<72x768xf32, #tpu.memory_space<vmem>>, vector<8x768xf32>,
    %c0_14 = arith.constant 0 : index
    %c145 = arith.constant 145 : index
    %13 = vector.load %arg1[%c0_14, %c145] : memref<8x1024xf32, #tpu.memory_space<vmem>>, vector<8x768xf32>
    %c48 = arith.constant 48 : index
    %c0_15 = arith.constant 0 : index
    %14 = vector.load %arg13[%c48, %c0_15] : memref<72x768xf32, #tpu.memory_space<vmem>>, vector<8x768xf32>
    tpu.vector_store %arg13[%c48, %c0_15], %13 {strides = array<i32>} : memref<72x768xf32, #tpu.memory_space<vmem>>, vector<8x768xf32>,
    %c0_16 = arith.constant 0 : index
    %c146 = arith.constant 146 : index
    %15 = vector.load %arg1[%c0_16, %c146] : memref<8x1024xf32, #tpu.memory_space<vmem>>, vector<8x768xf32>
    %c56 = arith.constant 56 : index
    %c0_17 = arith.constant 0 : index
    %16 = vector.load %arg13[%c56, %c0_17] : memref<72x768xf32, #tpu.memory_space<vmem>>, vector<8x768xf32>
    tpu.vector_store %arg13[%c56, %c0_17], %15 {strides = array<i32>} : memref<72x768xf32, #tpu.memory_space<vmem>>, vector<8x768xf32>,
    %c0_18 = arith.constant 0 : index
    %c147 = arith.constant 147 : index
    %17 = vector.load %arg1[%c0_18, %c147] : memref<8x1024xf32, #tpu.memory_space<vmem>>, vector<8x768xf32>
    %c64 = arith.constant 64 : index
    %c0_19 = arith.constant 0 : index
    %18 = vector.load %arg13[%c64, %c0_19] : memref<72x768xf32, #tpu.memory_space<vmem>>, vector<8x768xf32>
    tpu.vector_store %arg13[%c64, %c0_19], %17 {strides = array<i32>} : memref<72x768xf32, #tpu.memory_space<vmem>>, vector<8x768xf32>,
    %c0_20 = arith.constant 0 : index
    %c0_21 = arith.constant 0 : index
    %19 = vector.load %arg3[%c0_20, %c0_21] : memref<8x72xf32, #tpu.memory_space<vmem>>, vector<8x72xf32>
    %c0_22 = arith.constant 0 : index
    %c0_23 = arith.constant 0 : index
    %20 = vector.load %arg13[%c0_22, %c0_23] : memref<72x768xf32, #tpu.memory_space<vmem>>, vector<72x768xf32>
    %cst = arith.constant dense<0.000000e+00> : vector<8x768xf32>
    %21 = tpu.matmul %19, %20, %cst {dimension_numbers = #tpu.dot_dimension_numbers<[1], [0], [0], [1], [0, 0, 1, 1], [], []>} : vector<8x72xf32>, vector<72x768xf32>, vector<8x768xf32> -> vector<8x768xf32>
    %c0_24 = arith.constant 0 : index
    %c0_25 = arith.constant 0 : index
    %22 = vector.load %arg4[%c0_24, %c0_25] : memref<8x1xf32, #tpu.memory_space<vmem>>, vector<8x1xf32>
    %23 = vector.broadcast %22 : vector<8x1xf32> to vector<8x768xf32>
    %24 = arith.addf %21, %23 : vector<8x768xf32>
    %25 = vector.broadcast %0 : vector<1x768xf32> to vector<8x768xf32>
    %26 = arith.mulf %24, %25 : vector<8x768xf32>
    %cst_26 = arith.constant dense<0.000000e+00> : vector<8xf32>
    %27 = vector.multi_reduction <add>, %26, %cst_26 [1] : vector<8x768xf32> to vector<8xf32>
    %28 = vector.shape_cast %27 : vector<8xf32> to vector<8x1xf32>
    %cst_27 = arith.constant 0.001953125 : f32
    %29 = vector.broadcast %cst_27 : f32 to vector<8x1xf32>
    %30 = arith.mulf %28, %29 : vector<8x1xf32>
    %31 = vector.broadcast %30 : vector<8x1xf32> to vector<8x768xf32>
    %32 = arith.subf %24, %31 : vector<8x768xf32>
    %33 = vector.broadcast %0 : vector<1x768xf32> to vector<8x768xf32>
    %34 = arith.mulf %32, %33 : vector<8x768xf32>
    %35 = arith.mulf %34, %34 : vector<8x768xf32>
    %cst_28 = arith.constant dense<0.000000e+00> : vector<8xf32>
    %36 = vector.multi_reduction <add>, %35, %cst_28 [1] : vector<8x768xf32> to vector<8xf32>
    %37 = vector.shape_cast %36 : vector<8xf32> to vector<8x1xf32>
    %cst_29 = arith.constant 0.001953125 : f32
    %38 = vector.broadcast %cst_29 : f32 to vector<8x1xf32>
    %39 = arith.mulf %37, %38 : vector<8x1xf32>
    %c0_30 = arith.constant 0 : index
    %c0_31 = arith.constant 0 : index
    %40 = vector.load %arg5[%c0_30, %c0_31] : memref<8x1xf32, #tpu.memory_space<vmem>>, vector<8x1xf32>
    %cst_32 = arith.constant 9.99999974E-6 : f32
    %41 = vector.broadcast %cst_32 : f32 to vector<8x1xf32>
    %42 = arith.addf %39, %41 : vector<8x1xf32>
    %43 = math.rsqrt %42 : vector<8x1xf32>
    %44 = arith.mulf %40, %43 : vector<8x1xf32>
    %c0_33 = arith.constant 0 : index
    %c0_34 = arith.constant 0 : index
    %45 = vector.load %arg6[%c0_33, %c0_34] : memref<8x1xf32, #tpu.memory_space<vmem>>, vector<8x1xf32>
    %46 = arith.mulf %30, %44 : vector<8x1xf32>
    %47 = arith.subf %45, %46 : vector<8x1xf32>
    %48 = vector.broadcast %44 : vector<8x1xf32> to vector<8x768xf32>
    %49 = arith.mulf %24, %48 : vector<8x768xf32>
    %50 = vector.broadcast %47 : vector<8x1xf32> to vector<8x768xf32>
    %51 = arith.addf %49, %50 : vector<8x768xf32>
    %cst_35 = arith.constant 0.000000e+00 : f32
    %52 = vector.broadcast %cst_35 : f32 to vector<8x768xf32>
    %53 = arith.maximumf %51, %52 : vector<8x768xf32>
    %54 = vector.broadcast %0 : vector<1x768xf32> to vector<8x768xf32>
    %55 = arith.mulf %53, %54 : vector<8x768xf32>
    %cst_36 = arith.constant 0.000000e+00 : f32
    %56 = vector.broadcast %cst_36 : f32 to vector<8x128xf32>
    %c0_37 = arith.constant 0 : index
    %c0_38 = arith.constant 0 : index
    %57 = vector.load %arg12[%c0_37, %c0_38] : memref<8x1024xf32, #tpu.memory_space<vmem>>, vector<8x128xf32>
    tpu.vector_store %arg12[%c0_37, %c0_38], %56 {strides = array<i32>} : memref<8x1024xf32, #tpu.memory_space<vmem>>, vector<8x128xf32>,
    %cst_39 = arith.constant 0.000000e+00 : f32
    %58 = vector.broadcast %cst_39 : f32 to vector<8x128xf32>
    %c0_40 = arith.constant 0 : index
    %c896 = arith.constant 896 : index
    %59 = vector.load %arg12[%c0_40, %c896] : memref<8x1024xf32, #tpu.memory_space<vmem>>, vector<8x128xf32>
    tpu.vector_store %arg12[%c0_40, %c896], %58 {strides = array<i32>} : memref<8x1024xf32, #tpu.memory_space<vmem>>, vector<8x128xf32>,
    %c0_41 = arith.constant 0 : index
    %c128_42 = arith.constant 128 : index
    %60 = vector.load %arg12[%c0_41, %c128_42] : memref<8x1024xf32, #tpu.memory_space<vmem>>, vector<8x768xf32>
    tpu.vector_store %arg12[%c0_41, %c128_42], %55 {strides = array<i32>} : memref<8x1024xf32, #tpu.memory_space<vmem>>, vector<8x768xf32>,
    %c0_43 = arith.constant 0 : index
    %c109_44 = arith.constant 109 : index
    %61 = vector.load %arg12[%c0_43, %c109_44] : memref<8x1024xf32, #tpu.memory_space<vmem>>, vector<8x768xf32>
    %c0_45 = arith.constant 0 : index
    %c0_46 = arith.constant 0 : index
    %62 = vector.load %arg14[%c0_45, %c0_46] : memref<72x768xf32, #tpu.memory_space<vmem>>, vector<8x768xf32>
    tpu.vector_store %arg14[%c0_45, %c0_46], %61 {strides = array<i32>} : memref<72x768xf32, #tpu.memory_space<vmem>>, vector<8x768xf32>,
    %c0_47 = arith.constant 0 : index
    %c110_48 = arith.constant 110 : index
    %63 = vector.load %arg12[%c0_47, %c110_48] : memref<8x1024xf32, #tpu.memory_space<vmem>>, vector<8x768xf32>
    %c8_49 = arith.constant 8 : index
    %c0_50 = arith.constant 0 : index
    %64 = vector.load %arg14[%c8_49, %c0_50] : memref<72x768xf32, #tpu.memory_space<vmem>>, vector<8x768xf32>
    tpu.vector_store %arg14[%c8_49, %c0_50], %63 {strides = array<i32>} : memref<72x768xf32, #tpu.memory_space<vmem>>, vector<8x768xf32>,
    %c0_51 = arith.constant 0 : index
    %c111_52 = arith.constant 111 : index
    %65 = vector.load %arg12[%c0_51, %c111_52] : memref<8x1024xf32, #tpu.memory_space<vmem>>, vector<8x768xf32>
    %c16_53 = arith.constant 16 : index
    %c0_54 = arith.constant 0 : index
    %66 = vector.load %arg14[%c16_53, %c0_54] : memref<72x768xf32, #tpu.memory_space<vmem>>, vector<8x768xf32>
    tpu.vector_store %arg14[%c16_53, %c0_54], %65 {strides = array<i32>} : memref<72x768xf32, #tpu.memory_space<vmem>>, vector<8x768xf32>,
    %c0_55 = arith.constant 0 : index
    %c127_56 = arith.constant 127 : index
    %67 = vector.load %arg12[%c0_55, %c127_56] : memref<8x1024xf32, #tpu.memory_space<vmem>>, vector<8x768xf32>
    %c24_57 = arith.constant 24 : index
    %c0_58 = arith.constant 0 : index
    %68 = vector.load %arg14[%c24_57, %c0_58] : memref<72x768xf32, #tpu.memory_space<vmem>>, vector<8x768xf32>
    tpu.vector_store %arg14[%c24_57, %c0_58], %67 {strides = array<i32>} : memref<72x768xf32, #tpu.memory_space<vmem>>, vector<8x768xf32>,
    %c0_59 = arith.constant 0 : index
    %c128_60 = arith.constant 128 : index
    %69 = vector.load %arg12[%c0_59, %c128_60] : memref<8x1024xf32, #tpu.memory_space<vmem>>, vector<8x768xf32>
    %c32_61 = arith.constant 32 : index
    %c0_62 = arith.constant 0 : index
    %70 = vector.load %arg14[%c32_61, %c0_62] : memref<72x768xf32, #tpu.memory_space<vmem>>, vector<8x768xf32>
    tpu.vector_store %arg14[%c32_61, %c0_62], %69 {strides = array<i32>} : memref<72x768xf32, #tpu.memory_space<vmem>>, vector<8x768xf32>,
    %c0_63 = arith.constant 0 : index
    %c129_64 = arith.constant 129 : index
    %71 = vector.load %arg12[%c0_63, %c129_64] : memref<8x1024xf32, #tpu.memory_space<vmem>>, vector<8x768xf32>
    %c40_65 = arith.constant 40 : index
    %c0_66 = arith.constant 0 : index
    %72 = vector.load %arg14[%c40_65, %c0_66] : memref<72x768xf32, #tpu.memory_space<vmem>>, vector<8x768xf32>
    tpu.vector_store %arg14[%c40_65, %c0_66], %71 {strides = array<i32>} : memref<72x768xf32, #tpu.memory_space<vmem>>, vector<8x768xf32>,
    %c0_67 = arith.constant 0 : index
    %c145_68 = arith.constant 145 : index
    %73 = vector.load %arg12[%c0_67, %c145_68] : memref<8x1024xf32, #tpu.memory_space<vmem>>, vector<8x768xf32>
    %c48_69 = arith.constant 48 : index
    %c0_70 = arith.constant 0 : index
    %74 = vector.load %arg14[%c48_69, %c0_70] : memref<72x768xf32, #tpu.memory_space<vmem>>, vector<8x768xf32>
    tpu.vector_store %arg14[%c48_69, %c0_70], %73 {strides = array<i32>} : memref<72x768xf32, #tpu.memory_space<vmem>>, vector<8x768xf32>,
    %c0_71 = arith.constant 0 : index
    %c146_72 = arith.constant 146 : index
    %75 = vector.load %arg12[%c0_71, %c146_72] : memref<8x1024xf32, #tpu.memory_space<vmem>>, vector<8x768xf32>
    %c56_73 = arith.constant 56 : index
    %c0_74 = arith.constant 0 : index
    %76 = vector.load %arg14[%c56_73, %c0_74] : memref<72x768xf32, #tpu.memory_space<vmem>>, vector<8x768xf32>
    tpu.vector_store %arg14[%c56_73, %c0_74], %75 {strides = array<i32>} : memref<72x768xf32, #tpu.memory_space<vmem>>, vector<8x768xf32>,
    %c0_75 = arith.constant 0 : index
    %c147_76 = arith.constant 147 : index
    %77 = vector.load %arg12[%c0_75, %c147_76] : memref<8x1024xf32, #tpu.memory_space<vmem>>, vector<8x768xf32>
    %c64_77 = arith.constant 64 : index
    %c0_78 = arith.constant 0 : index
    %78 = vector.load %arg14[%c64_77, %c0_78] : memref<72x768xf32, #tpu.memory_space<vmem>>, vector<8x768xf32>
    tpu.vector_store %arg14[%c64_77, %c0_78], %77 {strides = array<i32>} : memref<72x768xf32, #tpu.memory_space<vmem>>, vector<8x768xf32>,
    %c0_79 = arith.constant 0 : index
    %c0_80 = arith.constant 0 : index
    %79 = vector.load %arg7[%c0_79, %c0_80] : memref<8x72xf32, #tpu.memory_space<vmem>>, vector<8x72xf32>
    %c0_81 = arith.constant 0 : index
    %c0_82 = arith.constant 0 : index
    %80 = vector.load %arg14[%c0_81, %c0_82] : memref<72x768xf32, #tpu.memory_space<vmem>>, vector<72x768xf32>
    %cst_83 = arith.constant dense<0.000000e+00> : vector<8x768xf32>
    %81 = tpu.matmul %79, %80, %cst_83 {dimension_numbers = #tpu.dot_dimension_numbers<[1], [0], [0], [1], [0, 0, 1, 1], [], []>} : vector<8x72xf32>, vector<72x768xf32>, vector<8x768xf32> -> vector<8x768xf32>
    %c0_84 = arith.constant 0 : index
    %c0_85 = arith.constant 0 : index
    %82 = vector.load %arg8[%c0_84, %c0_85] : memref<8x1xf32, #tpu.memory_space<vmem>>, vector<8x1xf32>
    %83 = vector.broadcast %82 : vector<8x1xf32> to vector<8x768xf32>
    %84 = arith.addf %81, %83 : vector<8x768xf32>
    %85 = vector.broadcast %0 : vector<1x768xf32> to vector<8x768xf32>
    %86 = arith.mulf %84, %85 : vector<8x768xf32>
    %cst_86 = arith.constant dense<0.000000e+00> : vector<8xf32>
    %87 = vector.multi_reduction <add>, %86, %cst_86 [1] : vector<8x768xf32> to vector<8xf32>
    %88 = vector.shape_cast %87 : vector<8xf32> to vector<8x1xf32>
    %cst_87 = arith.constant 0.001953125 : f32
    %89 = vector.broadcast %cst_87 : f32 to vector<8x1xf32>
    %90 = arith.mulf %88, %89 : vector<8x1xf32>
    %91 = vector.broadcast %90 : vector<8x1xf32> to vector<8x768xf32>
    %92 = arith.subf %84, %91 : vector<8x768xf32>
    %93 = vector.broadcast %0 : vector<1x768xf32> to vector<8x768xf32>
    %94 = arith.mulf %92, %93 : vector<8x768xf32>
    %95 = arith.mulf %94, %94 : vector<8x768xf32>
    %cst_88 = arith.constant dense<0.000000e+00> : vector<8xf32>
    %96 = vector.multi_reduction <add>, %95, %cst_88 [1] : vector<8x768xf32> to vector<8xf32>
    %97 = vector.shape_cast %96 : vector<8xf32> to vector<8x1xf32>
    %cst_89 = arith.constant 0.001953125 : f32
    %98 = vector.broadcast %cst_89 : f32 to vector<8x1xf32>
    %99 = arith.mulf %97, %98 : vector<8x1xf32>
    %c0_90 = arith.constant 0 : index
    %c0_91 = arith.constant 0 : index
    %100 = vector.load %arg9[%c0_90, %c0_91] : memref<8x1xf32, #tpu.memory_space<vmem>>, vector<8x1xf32>
    %cst_92 = arith.constant 9.99999974E-6 : f32
    %101 = vector.broadcast %cst_92 : f32 to vector<8x1xf32>
    %102 = arith.addf %99, %101 : vector<8x1xf32>
    %103 = math.rsqrt %102 : vector<8x1xf32>
    %104 = arith.mulf %100, %103 : vector<8x1xf32>
    %c0_93 = arith.constant 0 : index
    %c0_94 = arith.constant 0 : index
    %105 = vector.load %arg10[%c0_93, %c0_94] : memref<8x1xf32, #tpu.memory_space<vmem>>, vector<8x1xf32>
    %106 = arith.mulf %90, %104 : vector<8x1xf32>
    %107 = arith.subf %105, %106 : vector<8x1xf32>
    %108 = vector.broadcast %104 : vector<8x1xf32> to vector<8x768xf32>
    %109 = arith.mulf %84, %108 : vector<8x768xf32>
    %110 = vector.broadcast %107 : vector<8x1xf32> to vector<8x768xf32>
    %111 = arith.addf %109, %110 : vector<8x768xf32>
    %cst_95 = arith.constant 0.000000e+00 : f32
    %112 = vector.broadcast %cst_95 : f32 to vector<8x768xf32>
    %113 = arith.maximumf %111, %112 : vector<8x768xf32>
    %c0_96 = arith.constant 0 : index
    %c0_97 = arith.constant 0 : index
    %114 = vector.load %arg11[%c0_96, %c0_97] : memref<8x768xf32, #tpu.memory_space<vmem>>, vector<8x768xf32>
    tpu.vector_store %arg11[%c0_96, %c0_97], %113 {strides = array<i32>} : memref<8x768xf32, #tpu.memory_space<vmem>>, vector<8x768xf32>,
    return
  }
  func.func @transform_0(%arg0: i32) -> (i32, i32) {
    %c0_i32 = arith.constant 0 : i32
    %c0_i32_0 = arith.constant 0 : i32
    %c0_i32_1 = arith.constant 0 : i32
    return %c0_i32, %c0_i32_0 : i32, i32
  }
  func.func @transform_1(%arg0: i32) -> (i32, i32) {
    %c0_i32 = arith.constant 0 : i32
    %c0_i32_0 = arith.constant 0 : i32
    %c0_i32_1 = arith.constant 0 : i32
    return %c0_i32, %c0_i32_0 : i32, i32
  }
  func.func @transform_2(%arg0: i32) -> (i32, i32) {
    %c0_i32 = arith.constant 0 : i32
    %c0_i32_0 = arith.constant 0 : i32
    %c0_i32_1 = arith.constant 0 : i32
    return %c0_i32, %c0_i32_0 : i32, i32
  }
  func.func @transform_3(%arg0: i32) -> (i32, i32) {
    %c0_i32 = arith.constant 0 : i32
    %c0_i32_0 = arith.constant 0 : i32
    %c0_i32_1 = arith.constant 0 : i32
    return %c0_i32, %c0_i32_0 : i32, i32
  }
  func.func @transform_4(%arg0: i32) -> (i32, i32) {
    %c0_i32 = arith.constant 0 : i32
    %c0_i32_0 = arith.constant 0 : i32
    %c0_i32_1 = arith.constant 0 : i32
    return %c0_i32, %c0_i32_0 : i32, i32
  }
  func.func @transform_5(%arg0: i32) -> (i32, i32) {
    %c0_i32 = arith.constant 0 : i32
    %c0_i32_0 = arith.constant 0 : i32
    %c0_i32_1 = arith.constant 0 : i32
    return %c0_i32, %c0_i32_0 : i32, i32
  }
  func.func @transform_6(%arg0: i32) -> (i32, i32) {
    %c0_i32 = arith.constant 0 : i32
    %c0_i32_0 = arith.constant 0 : i32
    %c0_i32_1 = arith.constant 0 : i32
    return %c0_i32, %c0_i32_0 : i32, i32
  }
  func.func @transform_7(%arg0: i32) -> (i32, i32) {
    %c0_i32 = arith.constant 0 : i32
    %c0_i32_0 = arith.constant 0 : i32
    %c0_i32_1 = arith.constant 0 : i32
    return %c0_i32, %c0_i32_0 : i32, i32
  }
  func.func @transform_8(%arg0: i32) -> (i32, i32) {
    %c0_i32 = arith.constant 0 : i32
    %c0_i32_0 = arith.constant 0 : i32
    %c0_i32_1 = arith.constant 0 : i32
    return %c0_i32, %c0_i32_0 : i32, i32
  }
  func.func @transform_9(%arg0: i32) -> (i32, i32) {
    %c0_i32 = arith.constant 0 : i32
    %c0_i32_0 = arith.constant 0 : i32
    %c0_i32_1 = arith.constant 0 : i32
    return %c0_i32, %c0_i32_0 : i32, i32
  }
  func.func @transform_10(%arg0: i32) -> (i32, i32) {
    %c0_i32 = arith.constant 0 : i32
    %c0_i32_0 = arith.constant 0 : i32
    %c0_i32_1 = arith.constant 0 : i32
    return %c0_i32, %c0_i32_0 : i32, i32
  }
}

</mosaic_0001>

<llo_original>
// kernel: double_ds_conv.1
$region0: #{double_ds_conv.1}
  #allocation0 [shape = 'u32[]', space=smem, size = 0x4, offset = 0x4, fixed_abs, tag = 'smem constant byte address 0x4 - core index']
  #allocation1 [shape = 'u32[144,128]{1,0:T(1,128)}', space=vmem, size = 0x12000, scoped, tag = 'internal scratch']
  #allocation2 [shape = 'f32[8,1024]{1,0:T(8,128)}', space=vmem, size = 0x8000, scoped, tag = 'scratch operand']
  #allocation3 [shape = 'f32[72,768]{1,0:T(8,128)}', space=vmem, size = 0x36000, scoped, tag = 'scratch operand']
  #allocation4 [shape = 'f32[72,768]{1,0:T(8,128)}', space=vmem, size = 0x36000, scoped, tag = 'scratch operand']
  %s0 = inlined_call_operand.vmem [shape: f32[8,1024], index: 0, kind: input, shape index: {}]
  %s1 = inlined_call_operand.vmem [shape: f32[1,768], index: 1, kind: input, shape index: {}]
  %s2 = inlined_call_operand.vmem [shape: f32[8,72], index: 2, kind: input, shape index: {}]
  %s3 = inlined_call_operand.vmem [shape: f32[8,1], index: 3, kind: input, shape index: {}]
  %s4 = inlined_call_operand.vmem [shape: f32[8,1], index: 4, kind: input, shape index: {}]
  %s5 = inlined_call_operand.vmem [shape: f32[8,1], index: 5, kind: input, shape index: {}]
  %s6 = inlined_call_operand.vmem [shape: f32[8,72], index: 6, kind: input, shape index: {}]
  %s7 = inlined_call_operand.vmem [shape: f32[8,1], index: 7, kind: input, shape index: {}]
  %s8 = inlined_call_operand.vmem [shape: f32[8,1], index: 8, kind: input, shape index: {}]
  %s9 = inlined_call_operand.vmem [shape: f32[8,1], index: 9, kind: input, shape index: {}]
  %s10 = inlined_call_operand.vmem [shape: f32[8,768], index: 10, kind: output, shape index: {}]
  %s11 = sld [smem:[#allocation0]]
  $region50: #{double_ds_conv.1} parent=0
    _
  %s13 = ssub.s32 1, %s11
  %s14 = scalar_select 0, %s13, %s11
  // Predicated region
  $region2: #{double_ds_conv.1} parent=0 // pred_check
    _
  $region3: #{double_ds_conv.1} parent=0 // pred_check_branch
    %16 = sbr.rel (0) target = $region5
  $region4: #{double_ds_conv.1} parent=0 // pred_region
    _
  $region5: #{double_ds_conv.1} parent=0 // pred_fallthru
    _
  // Predicated region
  $region6: #{double_ds_conv.1} parent=0 // pred_check
    _
  $region7: #{double_ds_conv.1} parent=0 // pred_check_branch
    %18 = sbr.rel (0) target = $region9
  $region8: #{double_ds_conv.1} parent=0 // pred_region
    _
  $region9: #{double_ds_conv.1} parent=0 // pred_fallthru
    _
  // Predicated region
  $region10: #{double_ds_conv.1} parent=0 // pred_check
    _
  $region11: #{double_ds_conv.1} parent=0 // pred_check_branch
    %20 = sbr.rel (0) target = $region13
  $region12: #{double_ds_conv.1} parent=0 // pred_region
    _
  $region13: #{double_ds_conv.1} parent=0 // pred_fallthru
    _
  // Predicated region
  $region14: #{double_ds_conv.1} parent=0 // pred_check
    _
  $region15: #{double_ds_conv.1} parent=0 // pred_check_branch
    %22 = sbr.rel (0) target = $region17
  $region16: #{double_ds_conv.1} parent=0 // pred_region
    _
  $region17: #{double_ds_conv.1} parent=0 // pred_fallthru
    _
  // Predicated region
  $region18: #{double_ds_conv.1} parent=0 // pred_check
    _
  $region19: #{double_ds_conv.1} parent=0 // pred_check_branch
    %24 = sbr.rel (0) target = $region21
  $region20: #{double_ds_conv.1} parent=0 // pred_region
    _
  $region21: #{double_ds_conv.1} parent=0 // pred_fallthru
    _
  // Predicated region
  $region22: #{double_ds_conv.1} parent=0 // pred_check
    _
  $region23: #{double_ds_conv.1} parent=0 // pred_check_branch
    %26 = sbr.rel (0) target = $region25
  $region24: #{double_ds_conv.1} parent=0 // pred_region
    _
  $region25: #{double_ds_conv.1} parent=0 // pred_fallthru
    _
  // Predicated region
  $region26: #{double_ds_conv.1} parent=0 // pred_check
    _
  $region27: #{double_ds_conv.1} parent=0 // pred_check_branch
    %28 = sbr.rel (0) target = $region29
  $region28: #{double_ds_conv.1} parent=0 // pred_region
    _
  $region29: #{double_ds_conv.1} parent=0 // pred_fallthru
    _
  // Predicated region
  $region30: #{double_ds_conv.1} parent=0 // pred_check
    _
  $region31: #{double_ds_conv.1} parent=0 // pred_check_branch
    %30 = sbr.rel (0) target = $region33
  $region32: #{double_ds_conv.1} parent=0 // pred_region
    _
  $region33: #{double_ds_conv.1} parent=0 // pred_fallthru
    _
  // Predicated region
  $region34: #{double_ds_conv.1} parent=0 // pred_check
    _
  $region35: #{double_ds_conv.1} parent=0 // pred_check_branch
    %32 = sbr.rel (0) target = $region37
  $region36: #{double_ds_conv.1} parent=0 // pred_region
    _
  $region37: #{double_ds_conv.1} parent=0 // pred_fallthru
    _
  // Predicated region
  $region38: #{double_ds_conv.1} parent=0 // pred_check
    _
  $region39: #{double_ds_conv.1} parent=0 // pred_check_branch
    %34 = sbr.rel (0) target = $region41
  $region40: #{double_ds_conv.1} parent=0 // pred_region
    _
  $region41: #{double_ds_conv.1} parent=0 // pred_fallthru
    _
  %v35 = vld [vmem:[%s1] sm:$0x3f]
  %v36 = vld [vmem:[%s0] sm:$0xff]
  %v37 = vld [vmem:[%s0 + $0x8] sm:$0xff]
  %v38 = vld [vmem:[%s0 + $0x10] sm:$0xff]
  %v39 = vld [vmem:[%s0 + $0x18] sm:$0xff]
  %v40 = vld [vmem:[%s0 + $0x20] sm:$0xff]
  %v41 = vld [vmem:[%s0 + $0x28] sm:$0xff]
  %v42 = vld [vmem:[%s0 + $0x30] sm:$0xff]
  %50 = vrot.lane.b32.xlu0 %v36, 19
  %v51 = vpop.permute.xlu0 %50
  %52 = vrot.lane.b32.xlu0 %v37, 19
  %v53 = vpop.permute.xlu0 %52
  %54 = vrot.lane.b32.xlu0 %v38, 19
  %v55 = vpop.permute.xlu0 %54
  %56 = vrot.lane.b32.xlu0 %v39, 19
  %v57 = vpop.permute.xlu0 %56
  %58 = vrot.lane.b32.xlu0 %v40, 19
  %v59 = vpop.permute.xlu0 %58
  %60 = vrot.lane.b32.xlu0 %v41, 19
  %v61 = vpop.permute.xlu0 %60
  %62 = vrot.lane.b32.xlu0 %v42, 19
  %v63 = vpop.permute.xlu0 %62
  %vm64 = vcmask 154624
  %v65 = vsel %vm64, %v51, %v53
  %v66 = vsel %vm64, %v53, %v55
  %v67 = vsel %vm64, %v55, %v57
  %v68 = vsel %vm64, %v57, %v59
  %v69 = vsel %vm64, %v59, %v61
  %v70 = vsel %vm64, %v61, %v63
  %77 = vst [vmem:[#allocation3] sm:$0xff] %v65
  %78 = vst [vmem:[#allocation3 + $0x8] sm:$0xff] %v66
  %79 = vst [vmem:[#allocation3 + $0x10] sm:$0xff] %v67
  %80 = vst [vmem:[#allocation3 + $0x18] sm:$0xff] %v68
  %81 = vst [vmem:[#allocation3 + $0x20] sm:$0xff] %v69
  %82 = vst [vmem:[#allocation3 + $0x28] sm:$0xff] %v70
  %v83 = vld [vmem:[%s0] sm:$0xff]
  %v84 = vld [vmem:[%s0 + $0x8] sm:$0xff]
  %v85 = vld [vmem:[%s0 + $0x10] sm:$0xff]
  %v86 = vld [vmem:[%s0 + $0x18] sm:$0xff]
  %v87 = vld [vmem:[%s0 + $0x20] sm:$0xff]
  %v88 = vld [vmem:[%s0 + $0x28] sm:$0xff]
  %v89 = vld [vmem:[%s0 + $0x30] sm:$0xff]
  %97 = vrot.lane.b32.xlu0 %v83, 18
  %v98 = vpop.permute.xlu0 %97
  %99 = vrot.lane.b32.xlu0 %v84, 18
  %v100 = vpop.permute.xlu0 %99
  %101 = vrot.lane.b32.xlu0 %v85, 18
  %v102 = vpop.permute.xlu0 %101
  %103 = vrot.lane.b32.xlu0 %v86, 18
  %v104 = vpop.permute.xlu0 %103
  %105 = vrot.lane.b32.xlu0 %v87, 18
  %v106 = vpop.permute.xlu0 %105
  %107 = vrot.lane.b32.xlu0 %v88, 18
  %v108 = vpop.permute.xlu0 %107
  %109 = vrot.lane.b32.xlu0 %v89, 18
  %v110 = vpop.permute.xlu0 %109
  %vm111 = vcmask 146432
  %v112 = vsel %vm111, %v98, %v100
  %v113 = vsel %vm111, %v100, %v102
  %v114 = vsel %vm111, %v102, %v104
  %v115 = vsel %vm111, %v104, %v106
  %v116 = vsel %vm111, %v106, %v108
  %v117 = vsel %vm111, %v108, %v110
  %124 = vst [vmem:[#allocation3 + $0x30] sm:$0xff] %v112
  %125 = vst [vmem:[#allocation3 + $0x38] sm:$0xff] %v113
  %126 = vst [vmem:[#allocation3 + $0x40] sm:$0xff] %v114
  %127 = vst [vmem:[#allocation3 + $0x48] sm:$0xff] %v115
  %128 = vst [vmem:[#allocation3 + $0x50] sm:$0xff] %v116
  %129 = vst [vmem:[#allocation3 + $0x58] sm:$0xff] %v117
  %v130 = vld [vmem:[%s0] sm:$0xff]
  %v131 = vld [vmem:[%s0 + $0x8] sm:$0xff]
  %v132 = vld [vmem:[%s0 + $0x10] sm:$0xff]
  %v133 = vld [vmem:[%s0 + $0x18] sm:$0xff]
  %v134 = vld [vmem:[%s0 + $0x20] sm:$0xff]
  %v135 = vld [vmem:[%s0 + $0x28] sm:$0xff]
  %v136 = vld [vmem:[%s0 + $0x30] sm:$0xff]
  %144 = vrot.lane.b32.xlu0 %v130, 17
  %v145 = vpop.permute.xlu0 %144
  %146 = vrot.lane.b32.xlu0 %v131, 17
  %v147 = vpop.permute.xlu0 %146
  %148 = vrot.lane.b32.xlu0 %v132, 17
  %v149 = vpop.permute.xlu0 %148
  %150 = vrot.lane.b32.xlu0 %v133, 17
  %v151 = vpop.permute.xlu0 %150
  %152 = vrot.lane.b32.xlu0 %v134, 17
  %v153 = vpop.permute.xlu0 %152
  %154 = vrot.lane.b32.xlu0 %v135, 17
  %v155 = vpop.permute.xlu0 %154
  %156 = vrot.lane.b32.xlu0 %v136, 17
  %v157 = vpop.permute.xlu0 %156
  %vm158 = vcmask 138240
  %v159 = vsel %vm158, %v145, %v147
  %v160 = vsel %vm158, %v147, %v149
  %v161 = vsel %vm158, %v149, %v151
  %v162 = vsel %vm158, %v151, %v153
  %v163 = vsel %vm158, %v153, %v155
  %v164 = vsel %vm158, %v155, %v157
  %171 = vst [vmem:[#allocation3 + $0x60] sm:$0xff] %v159
  %172 = vst [vmem:[#allocation3 + $0x68] sm:$0xff] %v160
  %173 = vst [vmem:[#allocation3 + $0x70] sm:$0xff] %v161
  %174 = vst [vmem:[#allocation3 + $0x78] sm:$0xff] %v162
  %175 = vst [vmem:[#allocation3 + $0x80] sm:$0xff] %v163
  %176 = vst [vmem:[#allocation3 + $0x88] sm:$0xff] %v164
  %v177 = vld [vmem:[%s0] sm:$0xff]
  %v178 = vld [vmem:[%s0 + $0x8] sm:$0xff]
  %v179 = vld [vmem:[%s0 + $0x10] sm:$0xff]
  %v180 = vld [vmem:[%s0 + $0x18] sm:$0xff]
  %v181 = vld [vmem:[%s0 + $0x20] sm:$0xff]
  %v182 = vld [vmem:[%s0 + $0x28] sm:$0xff]
  %v183 = vld [vmem:[%s0 + $0x30] sm:$0xff]
  %191 = vrot.lane.b32.xlu0 %v177, 1
  %v192 = vpop.permute.xlu0 %191
  %193 = vrot.lane.b32.xlu0 %v178, 1
  %v194 = vpop.permute.xlu0 %193
  %195 = vrot.lane.b32.xlu0 %v179, 1
  %v196 = vpop.permute.xlu0 %195
  %197 = vrot.lane.b32.xlu0 %v180, 1
  %v198 = vpop.permute.xlu0 %197
  %199 = vrot.lane.b32.xlu0 %v181, 1
  %v200 = vpop.permute.xlu0 %199
  %201 = vrot.lane.b32.xlu0 %v182, 1
  %v202 = vpop.permute.xlu0 %201
  %203 = vrot.lane.b32.xlu0 %v183, 1
  %v204 = vpop.permute.xlu0 %203
  %vm205 = vcmask 7168
  %v206 = vsel %vm205, %v192, %v194
  %v207 = vsel %vm205, %v194, %v196
  %v208 = vsel %vm205, %v196, %v198
  %v209 = vsel %vm205, %v198, %v200
  %v210 = vsel %vm205, %v200, %v202
  %v211 = vsel %vm205, %v202, %v204
  %218 = vst [vmem:[#allocation3 + $0x90] sm:$0xff] %v206
  %219 = vst [vmem:[#allocation3 + $0x98] sm:$0xff] %v207
  %220 = vst [vmem:[#allocation3 + $0xa0] sm:$0xff] %v208
  %221 = vst [vmem:[#allocation3 + $0xa8] sm:$0xff] %v209
  %222 = vst [vmem:[#allocation3 + $0xb0] sm:$0xff] %v210
  %223 = vst [vmem:[#allocation3 + $0xb8] sm:$0xff] %v211
  %v224 = vld [vmem:[%s0 + $0x8] sm:$0xff]
  %v225 = vld [vmem:[%s0 + $0x10] sm:$0xff]
  %v226 = vld [vmem:[%s0 + $0x18] sm:$0xff]
  %v227 = vld [vmem:[%s0 + $0x20] sm:$0xff]
  %v228 = vld [vmem:[%s0 + $0x28] sm:$0xff]
  %v229 = vld [vmem:[%s0 + $0x30] sm:$0xff]
  %230 = vst [vmem:[#allocation3 + $0xc0] sm:$0xff] %v224
  %231 = vst [vmem:[#allocation3 + $0xc8] sm:$0xff] %v225
  %232 = vst [vmem:[#allocation3 + $0xd0] sm:$0xff] %v226
  %233 = vst [vmem:[#allocation3 + $0xd8] sm:$0xff] %v227
  %234 = vst [vmem:[#allocation3 + $0xe0] sm:$0xff] %v228
  %235 = vst [vmem:[#allocation3 + $0xe8] sm:$0xff] %v229
  %v236 = vld [vmem:[%s0 + $0x8] sm:$0xff]
  %v237 = vld [vmem:[%s0 + $0x10] sm:$0xff]
  %v238 = vld [vmem:[%s0 + $0x18] sm:$0xff]
  %v239 = vld [vmem:[%s0 + $0x20] sm:$0xff]
  %v240 = vld [vmem:[%s0 + $0x28] sm:$0xff]
  %v241 = vld [vmem:[%s0 + $0x30] sm:$0xff]
  %v242 = vld [vmem:[%s0 + $0x38] sm:$0xff]
  %250 = vrot.lane.b32.xlu0 %v236, 127
  %v251 = vpop.permute.xlu0 %250
  %252 = vrot.lane.b32.xlu0 %v237, 127
  %v253 = vpop.permute.xlu0 %252
  %254 = vrot.lane.b32.xlu0 %v238, 127
  %v255 = vpop.permute.xlu0 %254
  %256 = vrot.lane.b32.xlu0 %v239, 127
  %v257 = vpop.permute.xlu0 %256
  %258 = vrot.lane.b32.xlu0 %v240, 127
  %v259 = vpop.permute.xlu0 %258
  %260 = vrot.lane.b32.xlu0 %v241, 127
  %v261 = vpop.permute.xlu0 %260
  %262 = vrot.lane.b32.xlu0 %v242, 127
  %v263 = vpop.permute.xlu0 %262
  %vm264 = vcmask 1039360
  %v265 = vsel %vm264, %v251, %v253
  %v266 = vsel %vm264, %v253, %v255
  %v267 = vsel %vm264, %v255, %v257
  %v268 = vsel %vm264, %v257, %v259
  %v269 = vsel %vm264, %v259, %v261
  %v270 = vsel %vm264, %v261, %v263
  %277 = vst [vmem:[#allocation3 + $0xf0] sm:$0xff] %v265
  %278 = vst [vmem:[#allocation3 + $0xf8] sm:$0xff] %v266
  %279 = vst [vmem:[#allocation3 + $0x100] sm:$0xff] %v267
  %280 = vst [vmem:[#allocation3 + $0x108] sm:$0xff] %v268
  %281 = vst [vmem:[#allocation3 + $0x110] sm:$0xff] %v269
  %282 = vst [vmem:[#allocation3 + $0x118] sm:$0xff] %v270
  %v283 = vld [vmem:[%s0 + $0x8] sm:$0xff]
  %v284 = vld [vmem:[%s0 + $0x10] sm:$0xff]
  %v285 = vld [vmem:[%s0 + $0x18] sm:$0xff]
  %v286 = vld [vmem:[%s0 + $0x20] sm:$0xff]
  %v287 = vld [vmem:[%s0 + $0x28] sm:$0xff]
  %v288 = vld [vmem:[%s0 + $0x30] sm:$0xff]
  %v289 = vld [vmem:[%s0 + $0x38] sm:$0xff]
  %297 = vrot.lane.b32.xlu0 %v283, 111
  %v298 = vpop.permute.xlu0 %297
  %299 = vrot.lane.b32.xlu0 %v284, 111
  %v300 = vpop.permute.xlu0 %299
  %301 = vrot.lane.b32.xlu0 %v285, 111
  %v302 = vpop.permute.xlu0 %301
  %303 = vrot.lane.b32.xlu0 %v286, 111
  %v304 = vpop.permute.xlu0 %303
  %305 = vrot.lane.b32.xlu0 %v287, 111
  %v306 = vpop.permute.xlu0 %305
  %307 = vrot.lane.b32.xlu0 %v288, 111
  %v308 = vpop.permute.xlu0 %307
  %309 = vrot.lane.b32.xlu0 %v289, 111
  %v310 = vpop.permute.xlu0 %309
  %vm311 = vcmask 908288
  %v312 = vsel %vm311, %v298, %v300
  %v313 = vsel %vm311, %v300, %v302
  %v314 = vsel %vm311, %v302, %v304
  %v315 = vsel %vm311, %v304, %v306
  %v316 = vsel %vm311, %v306, %v308
  %v317 = vsel %vm311, %v308, %v310
  %324 = vst [vmem:[#allocation3 + $0x120] sm:$0xff] %v312
  %325 = vst [vmem:[#allocation3 + $0x128] sm:$0xff] %v313
  %326 = vst [vmem:[#allocation3 + $0x130] sm:$0xff] %v314
  %327 = vst [vmem:[#allocation3 + $0x138] sm:$0xff] %v315
  %328 = vst [vmem:[#allocation3 + $0x140] sm:$0xff] %v316
  %329 = vst [vmem:[#allocation3 + $0x148] sm:$0xff] %v317
  %v330 = vld [vmem:[%s0 + $0x8] sm:$0xff]
  %v331 = vld [vmem:[%s0 + $0x10] sm:$0xff]
  %v332 = vld [vmem:[%s0 + $0x18] sm:$0xff]
  %v333 = vld [vmem:[%s0 + $0x20] sm:$0xff]
  %v334 = vld [vmem:[%s0 + $0x28] sm:$0xff]
  %v335 = vld [vmem:[%s0 + $0x30] sm:$0xff]
  %v336 = vld [vmem:[%s0 + $0x38] sm:$0xff]
  %344 = vrot.lane.b32.xlu0 %v330, 110
  %v345 = vpop.permute.xlu0 %344
  %346 = vrot.lane.b32.xlu0 %v331, 110
  %v347 = vpop.permute.xlu0 %346
  %348 = vrot.lane.b32.xlu0 %v332, 110
  %v349 = vpop.permute.xlu0 %348
  %350 = vrot.lane.b32.xlu0 %v333, 110
  %v351 = vpop.permute.xlu0 %350
  %352 = vrot.lane.b32.xlu0 %v334, 110
  %v353 = vpop.permute.xlu0 %352
  %354 = vrot.lane.b32.xlu0 %v335, 110
  %v355 = vpop.permute.xlu0 %354
  %356 = vrot.lane.b32.xlu0 %v336, 110
  %v357 = vpop.permute.xlu0 %356
  %vm358 = vcmask 900096
  %v359 = vsel %vm358, %v345, %v347
  %v360 = vsel %vm358, %v347, %v349
  %v361 = vsel %vm358, %v349, %v351
  %v362 = vsel %vm358, %v351, %v353
  %v363 = vsel %vm358, %v353, %v355
  %v364 = vsel %vm358, %v355, %v357
  %371 = vst [vmem:[#allocation3 + $0x150] sm:$0xff] %v359
  %372 = vst [vmem:[#allocation3 + $0x158] sm:$0xff] %v360
  %373 = vst [vmem:[#allocation3 + $0x160] sm:$0xff] %v361
  %374 = vst [vmem:[#allocation3 + $0x168] sm:$0xff] %v362
  %375 = vst [vmem:[#allocation3 + $0x170] sm:$0xff] %v363
  %376 = vst [vmem:[#allocation3 + $0x178] sm:$0xff] %v364
  %v377 = vld [vmem:[%s0 + $0x8] sm:$0xff]
  %v378 = vld [vmem:[%s0 + $0x10] sm:$0xff]
  %v379 = vld [vmem:[%s0 + $0x18] sm:$0xff]
  %v380 = vld [vmem:[%s0 + $0x20] sm:$0xff]
  %v381 = vld [vmem:[%s0 + $0x28] sm:$0xff]
  %v382 = vld [vmem:[%s0 + $0x30] sm:$0xff]
  %v383 = vld [vmem:[%s0 + $0x38] sm:$0xff]
  %391 = vrot.lane.b32.xlu0 %v377, 109
  %v392 = vpop.permute.xlu0 %391
  %393 = vrot.lane.b32.xlu0 %v378, 109
  %v394 = vpop.permute.xlu0 %393
  %395 = vrot.lane.b32.xlu0 %v379, 109
  %v396 = vpop.permute.xlu0 %395
  %397 = vrot.lane.b32.xlu0 %v380, 109
  %v398 = vpop.permute.xlu0 %397
  %399 = vrot.lane.b32.xlu0 %v381, 109
  %v400 = vpop.permute.xlu0 %399
  %401 = vrot.lane.b32.xlu0 %v382, 109
  %v402 = vpop.permute.xlu0 %401
  %403 = vrot.lane.b32.xlu0 %v383, 109
  %v404 = vpop.permute.xlu0 %403
  %vm405 = vcmask 891904
  %v406 = vsel %vm405, %v392, %v394
  %v407 = vsel %vm405, %v394, %v396
  %v408 = vsel %vm405, %v396, %v398
  %v409 = vsel %vm405, %v398, %v400
  %v410 = vsel %vm405, %v400, %v402
  %v411 = vsel %vm405, %v402, %v404
  %418 = vst [vmem:[#allocation3 + $0x180] sm:$0xff] %v406
  %419 = vst [vmem:[#allocation3 + $0x188] sm:$0xff] %v407
  %420 = vst [vmem:[#allocation3 + $0x190] sm:$0xff] %v408
  %421 = vst [vmem:[#allocation3 + $0x198] sm:$0xff] %v409
  %422 = vst [vmem:[#allocation3 + $0x1a0] sm:$0xff] %v410
  %423 = vst [vmem:[#allocation3 + $0x1a8] sm:$0xff] %v411
  %v424 = vld [vmem:[%s2] sm:$0xff]
  %v425 = vld [vmem:[#allocation3] sm:$0xff]
  %v426 = vld [vmem:[#allocation3 + $0x8] sm:$0xff]
  %v427 = vld [vmem:[#allocation3 + $0x10] sm:$0xff]
  %v428 = vld [vmem:[#allocation3 + $0x18] sm:$0xff]
  %v429 = vld [vmem:[#allocation3 + $0x20] sm:$0xff]
  %v430 = vld [vmem:[#allocation3 + $0x28] sm:$0xff]
  %v431 = vld [vmem:[#allocation3 + $0x30] sm:$0xff]
  %v432 = vld [vmem:[#allocation3 + $0x38] sm:$0xff]
  %v433 = vld [vmem:[#allocation3 + $0x40] sm:$0xff]
  %v434 = vld [vmem:[#allocation3 + $0x48] sm:$0xff]
  %v435 = vld [vmem:[#allocation3 + $0x50] sm:$0xff]
  %v436 = vld [vmem:[#allocation3 + $0x58] sm:$0xff]
  %v437 = vld [vmem:[#allocation3 + $0x60] sm:$0xff]
  %v438 = vld [vmem:[#allocation3 + $0x68] sm:$0xff]
  %v439 = vld [vmem:[#allocation3 + $0x70] sm:$0xff]
  %v440 = vld [vmem:[#allocation3 + $0x78] sm:$0xff]
  %v441 = vld [vmem:[#allocation3 + $0x80] sm:$0xff]
  %v442 = vld [vmem:[#allocation3 + $0x88] sm:$0xff]
  %v443 = vld [vmem:[#allocation3 + $0x90] sm:$0xff]
  %v444 = vld [vmem:[#allocation3 + $0x98] sm:$0xff]
  %v445 = vld [vmem:[#allocation3 + $0xa0] sm:$0xff]
  %v446 = vld [vmem:[#allocation3 + $0xa8] sm:$0xff]
  %v447 = vld [vmem:[#allocation3 + $0xb0] sm:$0xff]
  %v448 = vld [vmem:[#allocation3 + $0xb8] sm:$0xff]
  %v449 = vld [vmem:[#allocation3 + $0xc0] sm:$0xff]
  %v450 = vld [vmem:[#allocation3 + $0xc8] sm:$0xff]
  %v451 = vld [vmem:[#allocation3 + $0xd0] sm:$0xff]
  %v452 = vld [vmem:[#allocation3 + $0xd8] sm:$0xff]
  %v453 = vld [vmem:[#allocation3 + $0xe0] sm:$0xff]
  %v454 = vld [vmem:[#allocation3 + $0xe8] sm:$0xff]
  %v455 = vld [vmem:[#allocation3 + $0xf0] sm:$0xff]
  %v456 = vld [vmem:[#allocation3 + $0xf8] sm:$0xff]
  %v457 = vld [vmem:[#allocation3 + $0x100] sm:$0xff]
  %v458 = vld [vmem:[#allocation3 + $0x108] sm:$0xff]
  %v459 = vld [vmem:[#allocation3 + $0x110] sm:$0xff]
  %v460 = vld [vmem:[#allocation3 + $0x118] sm:$0xff]
  %v461 = vld [vmem:[#allocation3 + $0x120] sm:$0xff]
  %v462 = vld [vmem:[#allocation3 + $0x128] sm:$0xff]
  %v463 = vld [vmem:[#allocation3 + $0x130] sm:$0xff]
  %v464 = vld [vmem:[#allocation3 + $0x138] sm:$0xff]
  %v465 = vld [vmem:[#allocation3 + $0x140] sm:$0xff]
  %v466 = vld [vmem:[#allocation3 + $0x148] sm:$0xff]
  %v467 = vld [vmem:[#allocation3 + $0x150] sm:$0xff]
  %v468 = vld [vmem:[#allocation3 + $0x158] sm:$0xff]
  %v469 = vld [vmem:[#allocation3 + $0x160] sm:$0xff]
  %v470 = vld [vmem:[#allocation3 + $0x168] sm:$0xff]
  %v471 = vld [vmem:[#allocation3 + $0x170] sm:$0xff]
  %v472 = vld [vmem:[#allocation3 + $0x178] sm:$0xff]
  %v473 = vld [vmem:[#allocation3 + $0x180] sm:$0xff]
  %v474 = vld [vmem:[#allocation3 + $0x188] sm:$0xff]
  %v475 = vld [vmem:[#allocation3 + $0x190] sm:$0xff]
  %v476 = vld [vmem:[#allocation3 + $0x198] sm:$0xff]
  %v477 = vld [vmem:[#allocation3 + $0x1a0] sm:$0xff]
  %v478 = vld [vmem:[#allocation3 + $0x1a8] sm:$0xff]
  %v479 = vld [vmem:[%s3] sm:$0xff]
  %481 = vset.pattern.permute.xlu0 0
  %482 = vperm.xlu0 %481, %v479
  %v483 = vpop.permute.xlu0 %482
  %vm485 = vcmask 588800
  %v487 = vsel %vm485, %v424, 0
  %489 = vmatprep.subr.mxu0 %v426
  %490 = vmatpush1.msra.mxu0 %v425
  %491 = vmatprep.subr.mxu0 %v432
  %492 = vmatpush1.msra.mxu0 %v431
  %493 = vmatprep.subr.mxu0 %v438
  %494 = vmatpush1.msra.mxu0 %v437
  %495 = vmatprep.subr.mxu0 %v444
  %496 = vmatpush1.msra.mxu0 %v443
  %497 = vmatprep.subr.mxu0 %v450
  %498 = vmatpush1.msra.mxu0 %v449
  %499 = vmatprep.subr.mxu0 %v456
  %500 = vmatpush1.msra.mxu0 %v455
  %501 = vmatprep.subr.mxu0 %v462
  %502 = vmatpush1.msra.mxu0 %v461
  %503 = vmatprep.subr.mxu0 %v468
  %504 = vmatpush1.msra.mxu0 %v467
  %505 = vmatprep.subr.mxu0 %v474
  %506 = vmatpush1.msra.mxu0 %v473
  %507 = vmatprep.subr.mxu0 0.0
  %508 = vmatpush1.msra.mxu0 0.0
  %509 = vmatprep.subr.mxu0 0.0
  %510 = vmatpush1.msra.mxu0 0.0
  %511 = vmatprep.subr.mxu0 0.0
  %512 = vmatpush1.msra.mxu0 0.0
  %513 = vmatprep.subr.mxu0 0.0
  %514 = vmatpush1.msra.mxu0 0.0
  %515 = vmatprep.subr.mxu0 0.0
  %516 = vmatpush1.msra.mxu0 0.0
  %517 = vmatprep.subr.mxu0 0.0
  %518 = vmatpush1.msra.mxu0 0.0
  %519 = vmatprep.subr.mxu0 0.0
  %520 = vmatpush1.msra.mxu0 0.0
  %521 = vmatprep.subr.mxu0 0.0
  %522 = vmatpush1.msra.mxu0 0.0
  %523 = vmatprep.subr.mxu0 0.0
  %524 = vmatpush1.msra.mxu0 0.0
  %525 = vmatprep.subr.mxu0 0.0
  %526 = vmatpush1.msra.mxu0 0.0
  %527 = vmatprep.subr.mxu0 0.0
  %528 = vmatpush1.msra.mxu0 0.0
  %529 = vmatprep.subr.mxu0 0.0
  %530 = vmatpush1.msra.mxu0 0.0
  %531 = vmatprep.subr.mxu0 0.0
  %532 = vmatpush1.msra.mxu0 0.0
  %533 = vmatprep.subr.mxu0 0.0
  %534 = vmatpush1.msra.mxu0 0.0
  %535 = vmatprep.subr.mxu0 0.0
  %536 = vmatpush1.msra.mxu0 0.0
  %537 = vmatprep.subr.mxu0 0.0
  %538 = vmatpush1.msra.mxu0 0.0
  %539 = vmatprep.subr.mxu0 0.0
  %540 = vmatpush1.msra.mxu0 0.0
  %541 = vmatprep.subr.mxu0 0.0
  %542 = vmatpush1.msra.mxu0 0.0
  %543 = vmatprep.subr.mxu0 0.0
  %544 = vmatpush1.msra.mxu0 0.0
  %545 = vmatprep.subr.mxu0 0.0
  %546 = vmatpush1.msra.mxu0 0.0
  %547 = vmatprep.subr.mxu0 0.0
  %548 = vmatpush1.msra.mxu0 0.0
  %549 = vmatprep.subr.mxu0 0.0
  %550 = vmatpush1.msra.mxu0 0.0
  %551 = vmatprep.subr.mxu0 0.0
  %552 = vmatpush1.msra.mxu0 0.0
  %553 = vmatprep.mubr.f32.mxu0 0.0
  %554 = vmatmul.mubr.f32.gmra.mrb[0].mxu0 %v487
  %v555 = vpop.f32.mrb[0].mxu0
  %v556 = vadd.f32 %v483, %v555
  %v557 = vpop.f32.mrb[0].mxu0
  %v558 = vadd.f32 %v483, %v557
  %559 = vdwg.mxu0
  %560 = vmatprep.subr.mxu0 %v428
  %561 = vmatpush1.msra.mxu0 %v427
  %562 = vmatprep.subr.mxu0 %v434
  %563 = vmatpush1.msra.mxu0 %v433
  %564 = vmatprep.subr.mxu0 %v440
  %565 = vmatpush1.msra.mxu0 %v439
  %566 = vmatprep.subr.mxu0 %v446
  %567 = vmatpush1.msra.mxu0 %v445
  %568 = vmatprep.subr.mxu0 %v452
  %569 = vmatpush1.msra.mxu0 %v451
  %570 = vmatprep.subr.mxu0 %v458
  %571 = vmatpush1.msra.mxu0 %v457
  %572 = vmatprep.subr.mxu0 %v464
  %573 = vmatpush1.msra.mxu0 %v463
  %574 = vmatprep.subr.mxu0 %v470
  %575 = vmatpush1.msra.mxu0 %v469
  %576 = vmatprep.subr.mxu0 %v476
  %577 = vmatpush1.msra.mxu0 %v475
  %578 = vmatprep.subr.mxu0 0.0
  %579 = vmatpush1.msra.mxu0 0.0
  %580 = vmatprep.subr.mxu0 0.0
  %581 = vmatpush1.msra.mxu0 0.0
  %582 = vmatprep.subr.mxu0 0.0
  %583 = vmatpush1.msra.mxu0 0.0
  %584 = vmatprep.subr.mxu0 0.0
  %585 = vmatpush1.msra.mxu0 0.0
  %586 = vmatprep.subr.mxu0 0.0
  %587 = vmatpush1.msra.mxu0 0.0
  %588 = vmatprep.subr.mxu0 0.0
  %589 = vmatpush1.msra.mxu0 0.0
  %590 = vmatprep.subr.mxu0 0.0
  %591 = vmatpush1.msra.mxu0 0.0
  %592 = vmatprep.subr.mxu0 0.0
  %593 = vmatpush1.msra.mxu0 0.0
  %594 = vmatprep.subr.mxu0 0.0
  %595 = vmatpush1.msra.mxu0 0.0
  %596 = vmatprep.subr.mxu0 0.0
  %597 = vmatpush1.msra.mxu0 0.0
  %598 = vmatprep.subr.mxu0 0.0
  %599 = vmatpush1.msra.mxu0 0.0
  %600 = vmatprep.subr.mxu0 0.0
  %601 = vmatpush1.msra.mxu0 0.0
  %602 = vmatprep.subr.mxu0 0.0
  %603 = vmatpush1.msra.mxu0 0.0
  %604 = vmatprep.subr.mxu0 0.0
  %605 = vmatpush1.msra.mxu0 0.0
  %606 = vmatprep.subr.mxu0 0.0
  %607 = vmatpush1.msra.mxu0 0.0
  %608 = vmatprep.subr.mxu0 0.0
  %609 = vmatpush1.msra.mxu0 0.0
  %610 = vmatprep.subr.mxu0 0.0
  %611 = vmatpush1.msra.mxu0 0.0
  %612 = vmatprep.subr.mxu0 0.0
  %613 = vmatpush1.msra.mxu0 0.0
  %614 = vmatprep.subr.mxu0 0.0
  %615 = vmatpush1.msra.mxu0 0.0
  %616 = vmatprep.subr.mxu0 0.0
  %617 = vmatpush1.msra.mxu0 0.0
  %618 = vmatprep.subr.mxu0 0.0
  %619 = vmatpush1.msra.mxu0 0.0
  %620 = vmatprep.subr.mxu0 0.0
  %621 = vmatpush1.msra.mxu0 0.0
  %622 = vmatprep.subr.mxu0 0.0
  %623 = vmatpush1.msra.mxu0 0.0
  %624 = vmatprep.mubr.f32.mxu0 0.0
  %625 = vmatmul.mubr.f32.gmra.mrb[0].mxu0 %v487
  %v626 = vpop.f32.mrb[0].mxu0
  %v627 = vadd.f32 %v483, %v626
  %v628 = vpop.f32.mrb[0].mxu0
  %v629 = vadd.f32 %v483, %v628
  %630 = vdwg.mxu0
  %631 = vmatprep.subr.mxu0 %v430
  %632 = vmatpush1.msra.mxu0 %v429
  %633 = vmatprep.subr.mxu0 %v436
  %634 = vmatpush1.msra.mxu0 %v435
  %635 = vmatprep.subr.mxu0 %v442
  %636 = vmatpush1.msra.mxu0 %v441
  %637 = vmatprep.subr.mxu0 %v448
  %638 = vmatpush1.msra.mxu0 %v447
  %639 = vmatprep.subr.mxu0 %v454
  %640 = vmatpush1.msra.mxu0 %v453
  %641 = vmatprep.subr.mxu0 %v460
  %642 = vmatpush1.msra.mxu0 %v459
  %643 = vmatprep.subr.mxu0 %v466
  %644 = vmatpush1.msra.mxu0 %v465
  %645 = vmatprep.subr.mxu0 %v472
  %646 = vmatpush1.msra.mxu0 %v471
  %647 = vmatprep.subr.mxu0 %v478
  %648 = vmatpush1.msra.mxu0 %v477
  %649 = vmatprep.subr.mxu0 0.0
  %650 = vmatpush1.msra.mxu0 0.0
  %651 = vmatprep.subr.mxu0 0.0
  %652 = vmatpush1.msra.mxu0 0.0
  %653 = vmatprep.subr.mxu0 0.0
  %654 = vmatpush1.msra.mxu0 0.0
  %655 = vmatprep.subr.mxu0 0.0
  %656 = vmatpush1.msra.mxu0 0.0
  %657 = vmatprep.subr.mxu0 0.0
  %658 = vmatpush1.msra.mxu0 0.0
  %659 = vmatprep.subr.mxu0 0.0
  %660 = vmatpush1.msra.mxu0 0.0
  %661 = vmatprep.subr.mxu0 0.0
  %662 = vmatpush1.msra.mxu0 0.0
  %663 = vmatprep.subr.mxu0 0.0
  %664 = vmatpush1.msra.mxu0 0.0
  %665 = vmatprep.subr.mxu0 0.0
  %666 = vmatpush1.msra.mxu0 0.0
  %667 = vmatprep.subr.mxu0 0.0
  %668 = vmatpush1.msra.mxu0 0.0
  %669 = vmatprep.subr.mxu0 0.0
  %670 = vmatpush1.msra.mxu0 0.0
  %671 = vmatprep.subr.mxu0 0.0
  %672 = vmatpush1.msra.mxu0 0.0
  %673 = vmatprep.subr.mxu0 0.0
  %674 = vmatpush1.msra.mxu0 0.0
  %675 = vmatprep.subr.mxu0 0.0
  %676 = vmatpush1.msra.mxu0 0.0
  %677 = vmatprep.subr.mxu0 0.0
  %678 = vmatpush1.msra.mxu0 0.0
  %679 = vmatprep.subr.mxu0 0.0
  %680 = vmatpush1.msra.mxu0 0.0
  %681 = vmatprep.subr.mxu0 0.0
  %682 = vmatpush1.msra.mxu0 0.0
  %683 = vmatprep.subr.mxu0 0.0
  %684 = vmatpush1.msra.mxu0 0.0
  %685 = vmatprep.subr.mxu0 0.0
  %686 = vmatpush1.msra.mxu0 0.0
  %687 = vmatprep.subr.mxu0 0.0
  %688 = vmatpush1.msra.mxu0 0.0
  %689 = vmatprep.subr.mxu0 0.0
  %690 = vmatpush1.msra.mxu0 0.0
  %691 = vmatprep.subr.mxu0 0.0
  %692 = vmatpush1.msra.mxu0 0.0
  %693 = vmatprep.subr.mxu0 0.0
  %694 = vmatpush1.msra.mxu0 0.0
  %695 = vmatprep.mubr.f32.mxu0 0.0
  %696 = vmatmul.mubr.f32.gmra.mrb[0].mxu0 %v487
  %v697 = vpop.f32.mrb[0].mxu0
  %v698 = vadd.f32 %v483, %v697
  %v699 = vpop.f32.mrb[0].mxu0
  %v700 = vadd.f32 %v483, %v699
  %701 = vdwg.mxu0
  %v703 = vlaneseq
  %v704 = vshrl.u32 %v703, 7
  %v705 = vsub.s32 0, %v704
  %v706 = vrot.slane %v35, %v705
  %v707 = vlaneseq
  %v708 = vshrl.u32 %v707, 7
  %v709 = vsub.s32 1, %v708
  %v710 = vrot.slane %v35, %v709
  %v711 = vlaneseq
  %v712 = vshrl.u32 %v711, 7
  %v713 = vsub.s32 2, %v712
  %v714 = vrot.slane %v35, %v713
  %v715 = vlaneseq
  %v716 = vshrl.u32 %v715, 7
  %v717 = vsub.s32 3, %v716
  %v718 = vrot.slane %v35, %v717
  %v719 = vlaneseq
  %v720 = vshrl.u32 %v719, 7
  %v721 = vsub.s32 4, %v720
  %v722 = vrot.slane %v35, %v721
  %v723 = vlaneseq
  %v724 = vshrl.u32 %v723, 7
  %v725 = vsub.s32 5, %v724
  %v726 = vrot.slane %v35, %v725
  %v733 = vmul.f32 %v556, %v706
  %v734 = vmul.f32 %v558, %v710
  %v735 = vmul.f32 %v627, %v714
  %v736 = vmul.f32 %v629, %v718
  %v737 = vmul.f32 %v698, %v722
  %v738 = vmul.f32 %v700, %v726
  %v739 = vadd.f32 %v733, %v734
  %v740 = vadd.f32 %v739, %v735
  %v741 = vadd.f32 %v740, %v736
  %v742 = vadd.f32 %v741, %v737
  %v743 = vadd.f32 %v742, %v738
  %744 = vadd.xlane.f32.xlu0 %v743
  %v745 = vpop.xlane.xlu0 %744
  %v746 = vmul.f32 %v745, 0.001953125
  %v747 = vsub.f32 %v556, %v746
  %v748 = vsub.f32 %v558, %v746
  %v749 = vsub.f32 %v627, %v746
  %v750 = vsub.f32 %v629, %v746
  %v751 = vsub.f32 %v698, %v746
  %v752 = vsub.f32 %v700, %v746
  %v753 = vmul.f32 %v747, %v706
  %v754 = vmul.f32 %v748, %v710
  %v755 = vmul.f32 %v749, %v714
  %v756 = vmul.f32 %v750, %v718
  %v757 = vmul.f32 %v751, %v722
  %v758 = vmul.f32 %v752, %v726
  %v759 = vmul.f32 %v753, %v753
  %v760 = vmul.f32 %v754, %v754
  %v761 = vmul.f32 %v755, %v755
  %v762 = vmul.f32 %v756, %v756
  %v763 = vmul.f32 %v757, %v757
  %v764 = vmul.f32 %v758, %v758
  %v765 = vadd.f32 %v759, %v760
  %v766 = vadd.f32 %v765, %v761
  %v767 = vadd.f32 %v766, %v762
  %v768 = vadd.f32 %v767, %v763
  %v769 = vadd.f32 %v768, %v764
  %770 = vadd.xlane.f32.xlu0 %v769
  %v771 = vpop.xlane.xlu0 %770
  %v772 = vmul.f32 %v771, 0.001953125
  %v773 = vld [vmem:[%s4] sm:$0xff]
  %v774 = vadd.f32 %v772, 1e-05
  %v775 = vrsqrt.pop %v774
  %v776 = vmul.f32 %v773, %v775
  %v777 = vld [vmem:[%s5] sm:$0xff]
  %v778 = vmul.f32 %v746, %v776
  %v779 = vsub.f32 %v777, %v778
  %781 = vset.pattern.permute.xlu0 0
  %782 = vperm.xlu0 %781, %v776
  %v783 = vpop.permute.xlu0 %782
  %v785 = vmul.f32 %v556, %v783
  %v786 = vmul.f32 %v558, %v783
  %v787 = vmul.f32 %v627, %v783
  %v788 = vmul.f32 %v629, %v783
  %v789 = vmul.f32 %v698, %v783
  %v790 = vmul.f32 %v700, %v783
  %792 = vset.pattern.permute.xlu0 0
  %793 = vperm.xlu0 %792, %v779
  %v794 = vpop.permute.xlu0 %793
  %v796 = vadd.f32 %v785, %v794
  %v797 = vadd.f32 %v786, %v794
  %v798 = vadd.f32 %v787, %v794
  %v799 = vadd.f32 %v788, %v794
  %v800 = vadd.f32 %v789, %v794
  %v801 = vadd.f32 %v790, %v794
  %v802 = vmax.f32 %v796, 0.0
  %v803 = vmax.f32 %v797, 0.0
  %v804 = vmax.f32 %v798, 0.0
  %v805 = vmax.f32 %v799, 0.0
  %v806 = vmax.f32 %v800, 0.0
  %v807 = vmax.f32 %v801, 0.0
  %v808 = vmul.f32 %v802, %v706
  %v809 = vmul.f32 %v803, %v710
  %v810 = vmul.f32 %v804, %v714
  %v811 = vmul.f32 %v805, %v718
  %v812 = vmul.f32 %v806, %v722
  %v813 = vmul.f32 %v807, %v726
  %814 = vst [vmem:[#allocation2] sm:$0xff] 0.0
  %815 = vst [vmem:[#allocation2 + $0x38] sm:$0xff] 0.0
  %816 = vst [vmem:[#allocation2 + $0x8] sm:$0xff] %v808
  %817 = vst [vmem:[#allocation2 + $0x10] sm:$0xff] %v809
  %818 = vst [vmem:[#allocation2 + $0x18] sm:$0xff] %v810
  %819 = vst [vmem:[#allocation2 + $0x20] sm:$0xff] %v811
  %820 = vst [vmem:[#allocation2 + $0x28] sm:$0xff] %v812
  %821 = vst [vmem:[#allocation2 + $0x30] sm:$0xff] %v813
  %v822 = vld [vmem:[#allocation2] sm:$0xff]
  %v823 = vld [vmem:[#allocation2 + $0x8] sm:$0xff]
  %v824 = vld [vmem:[#allocation2 + $0x10] sm:$0xff]
  %v825 = vld [vmem:[#allocation2 + $0x18] sm:$0xff]
  %v826 = vld [vmem:[#allocation2 + $0x20] sm:$0xff]
  %v827 = vld [vmem:[#allocation2 + $0x28] sm:$0xff]
  %v828 = vld [vmem:[#allocation2 + $0x30] sm:$0xff]
  %836 = vrot.lane.b32.xlu0 %v822, 19
  %v837 = vpop.permute.xlu0 %836
  %838 = vrot.lane.b32.xlu0 %v823, 19
  %v839 = vpop.permute.xlu0 %838
  %840 = vrot.lane.b32.xlu0 %v824, 19
  %v841 = vpop.permute.xlu0 %840
  %842 = vrot.lane.b32.xlu0 %v825, 19
  %v843 = vpop.permute.xlu0 %842
  %844 = vrot.lane.b32.xlu0 %v826, 19
  %v845 = vpop.permute.xlu0 %844
  %846 = vrot.lane.b32.xlu0 %v827, 19
  %v847 = vpop.permute.xlu0 %846
  %848 = vrot.lane.b32.xlu0 %v828, 19
  %v849 = vpop.permute.xlu0 %848
  %v850 = vsel %vm64, %v837, %v839
  %v851 = vsel %vm64, %v839, %v841
  %v852 = vsel %vm64, %v841, %v843
  %v853 = vsel %vm64, %v843, %v845
  %v854 = vsel %vm64, %v845, %v847
  %v855 = vsel %vm64, %v847, %v849
  %862 = vst [vmem:[#allocation4] sm:$0xff] %v850
  %863 = vst [vmem:[#allocation4 + $0x8] sm:$0xff] %v851
  %864 = vst [vmem:[#allocation4 + $0x10] sm:$0xff] %v852
  %865 = vst [vmem:[#allocation4 + $0x18] sm:$0xff] %v853
  %866 = vst [vmem:[#allocation4 + $0x20] sm:$0xff] %v854
  %867 = vst [vmem:[#allocation4 + $0x28] sm:$0xff] %v855
  %v868 = vld [vmem:[#allocation2] sm:$0xff]
  %v869 = vld [vmem:[#allocation2 + $0x8] sm:$0xff]
  %v870 = vld [vmem:[#allocation2 + $0x10] sm:$0xff]
  %v871 = vld [vmem:[#allocation2 + $0x18] sm:$0xff]
  %v872 = vld [vmem:[#allocation2 + $0x20] sm:$0xff]
  %v873 = vld [vmem:[#allocation2 + $0x28] sm:$0xff]
  %v874 = vld [vmem:[#allocation2 + $0x30] sm:$0xff]
  %882 = vrot.lane.b32.xlu0 %v868, 18
  %v883 = vpop.permute.xlu0 %882
  %884 = vrot.lane.b32.xlu0 %v869, 18
  %v885 = vpop.permute.xlu0 %884
  %886 = vrot.lane.b32.xlu0 %v870, 18
  %v887 = vpop.permute.xlu0 %886
  %888 = vrot.lane.b32.xlu0 %v871, 18
  %v889 = vpop.permute.xlu0 %888
  %890 = vrot.lane.b32.xlu0 %v872, 18
  %v891 = vpop.permute.xlu0 %890
  %892 = vrot.lane.b32.xlu0 %v873, 18
  %v893 = vpop.permute.xlu0 %892
  %894 = vrot.lane.b32.xlu0 %v874, 18
  %v895 = vpop.permute.xlu0 %894
  %v896 = vsel %vm111, %v883, %v885
  %v897 = vsel %vm111, %v885, %v887
  %v898 = vsel %vm111, %v887, %v889
  %v899 = vsel %vm111, %v889, %v891
  %v900 = vsel %vm111, %v891, %v893
  %v901 = vsel %vm111, %v893, %v895
  %908 = vst [vmem:[#allocation4 + $0x30] sm:$0xff] %v896
  %909 = vst [vmem:[#allocation4 + $0x38] sm:$0xff] %v897
  %910 = vst [vmem:[#allocation4 + $0x40] sm:$0xff] %v898
  %911 = vst [vmem:[#allocation4 + $0x48] sm:$0xff] %v899
  %912 = vst [vmem:[#allocation4 + $0x50] sm:$0xff] %v900
  %913 = vst [vmem:[#allocation4 + $0x58] sm:$0xff] %v901
  %v914 = vld [vmem:[#allocation2] sm:$0xff]
  %v915 = vld [vmem:[#allocation2 + $0x8] sm:$0xff]
  %v916 = vld [vmem:[#allocation2 + $0x10] sm:$0xff]
  %v917 = vld [vmem:[#allocation2 + $0x18] sm:$0xff]
  %v918 = vld [vmem:[#allocation2 + $0x20] sm:$0xff]
  %v919 = vld [vmem:[#allocation2 + $0x28] sm:$0xff]
  %v920 = vld [vmem:[#allocation2 + $0x30] sm:$0xff]
  %928 = vrot.lane.b32.xlu0 %v914, 17
  %v929 = vpop.permute.xlu0 %928
  %930 = vrot.lane.b32.xlu0 %v915, 17
  %v931 = vpop.permute.xlu0 %930
  %932 = vrot.lane.b32.xlu0 %v916, 17
  %v933 = vpop.permute.xlu0 %932
  %934 = vrot.lane.b32.xlu0 %v917, 17
  %v935 = vpop.permute.xlu0 %934
  %936 = vrot.lane.b32.xlu0 %v918, 17
  %v937 = vpop.permute.xlu0 %936
  %938 = vrot.lane.b32.xlu0 %v919, 17
  %v939 = vpop.permute.xlu0 %938
  %940 = vrot.lane.b32.xlu0 %v920, 17
  %v941 = vpop.permute.xlu0 %940
  %v942 = vsel %vm158, %v929, %v931
  %v943 = vsel %vm158, %v931, %v933
  %v944 = vsel %vm158, %v933, %v935
  %v945 = vsel %vm158, %v935, %v937
  %v946 = vsel %vm158, %v937, %v939
  %v947 = vsel %vm158, %v939, %v941
  %954 = vst [vmem:[#allocation4 + $0x60] sm:$0xff] %v942
  %955 = vst [vmem:[#allocation4 + $0x68] sm:$0xff] %v943
  %956 = vst [vmem:[#allocation4 + $0x70] sm:$0xff] %v944
  %957 = vst [vmem:[#allocation4 + $0x78] sm:$0xff] %v945
  %958 = vst [vmem:[#allocation4 + $0x80] sm:$0xff] %v946
  %959 = vst [vmem:[#allocation4 + $0x88] sm:$0xff] %v947
  %v960 = vld [vmem:[#allocation2] sm:$0xff]
  %v961 = vld [vmem:[#allocation2 + $0x8] sm:$0xff]
  %v962 = vld [vmem:[#allocation2 + $0x10] sm:$0xff]
  %v963 = vld [vmem:[#allocation2 + $0x18] sm:$0xff]
  %v964 = vld [vmem:[#allocation2 + $0x20] sm:$0xff]
  %v965 = vld [vmem:[#allocation2 + $0x28] sm:$0xff]
  %v966 = vld [vmem:[#allocation2 + $0x30] sm:$0xff]
  %974 = vrot.lane.b32.xlu0 %v960, 1
  %v975 = vpop.permute.xlu0 %974
  %976 = vrot.lane.b32.xlu0 %v961, 1
  %v977 = vpop.permute.xlu0 %976
  %978 = vrot.lane.b32.xlu0 %v962, 1
  %v979 = vpop.permute.xlu0 %978
  %980 = vrot.lane.b32.xlu0 %v963, 1
  %v981 = vpop.permute.xlu0 %980
  %982 = vrot.lane.b32.xlu0 %v964, 1
  %v983 = vpop.permute.xlu0 %982
  %984 = vrot.lane.b32.xlu0 %v965, 1
  %v985 = vpop.permute.xlu0 %984
  %986 = vrot.lane.b32.xlu0 %v966, 1
  %v987 = vpop.permute.xlu0 %986
  %v988 = vsel %vm205, %v975, %v977
  %v989 = vsel %vm205, %v977, %v979
  %v990 = vsel %vm205, %v979, %v981
  %v991 = vsel %vm205, %v981, %v983
  %v992 = vsel %vm205, %v983, %v985
  %v993 = vsel %vm205, %v985, %v987
  %1000 = vst [vmem:[#allocation4 + $0x90] sm:$0xff] %v988
  %1001 = vst [vmem:[#allocation4 + $0x98] sm:$0xff] %v989
  %1002 = vst [vmem:[#allocation4 + $0xa0] sm:$0xff] %v990
  %1003 = vst [vmem:[#allocation4 + $0xa8] sm:$0xff] %v991
  %1004 = vst [vmem:[#allocation4 + $0xb0] sm:$0xff] %v992
  %1005 = vst [vmem:[#allocation4 + $0xb8] sm:$0xff] %v993
  %v1006 = vld [vmem:[#allocation2 + $0x8] sm:$0xff]
  %v1007 = vld [vmem:[#allocation2 + $0x10] sm:$0xff]
  %v1008 = vld [vmem:[#allocation2 + $0x18] sm:$0xff]
  %v1009 = vld [vmem:[#allocation2 + $0x20] sm:$0xff]
  %v1010 = vld [vmem:[#allocation2 + $0x28] sm:$0xff]
  %v1011 = vld [vmem:[#allocation2 + $0x30] sm:$0xff]
  %1012 = vst [vmem:[#allocation4 + $0xc0] sm:$0xff] %v1006
  %1013 = vst [vmem:[#allocation4 + $0xc8] sm:$0xff] %v1007
  %1014 = vst [vmem:[#allocation4 + $0xd0] sm:$0xff] %v1008
  %1015 = vst [vmem:[#allocation4 + $0xd8] sm:$0xff] %v1009
  %1016 = vst [vmem:[#allocation4 + $0xe0] sm:$0xff] %v1010
  %1017 = vst [vmem:[#allocation4 + $0xe8] sm:$0xff] %v1011
  %v1018 = vld [vmem:[#allocation2 + $0x8] sm:$0xff]
  %v1019 = vld [vmem:[#allocation2 + $0x10] sm:$0xff]
  %v1020 = vld [vmem:[#allocation2 + $0x18] sm:$0xff]
  %v1021 = vld [vmem:[#allocation2 + $0x20] sm:$0xff]
  %v1022 = vld [vmem:[#allocation2 + $0x28] sm:$0xff]
  %v1023 = vld [vmem:[#allocation2 + $0x30] sm:$0xff]
  %v1024 = vld [vmem:[#allocation2 + $0x38] sm:$0xff]
  %1032 = vrot.lane.b32.xlu0 %v1018, 127
  %v1033 = vpop.permute.xlu0 %1032
  %1034 = vrot.lane.b32.xlu0 %v1019, 127
  %v1035 = vpop.permute.xlu0 %1034
  %1036 = vrot.lane.b32.xlu0 %v1020, 127
  %v1037 = vpop.permute.xlu0 %1036
  %1038 = vrot.lane.b32.xlu0 %v1021, 127
  %v1039 = vpop.permute.xlu0 %1038
  %1040 = vrot.lane.b32.xlu0 %v1022, 127
  %v1041 = vpop.permute.xlu0 %1040
  %1042 = vrot.lane.b32.xlu0 %v1023, 127
  %v1043 = vpop.permute.xlu0 %1042
  %1044 = vrot.lane.b32.xlu0 %v1024, 127
  %v1045 = vpop.permute.xlu0 %1044
  %v1046 = vsel %vm264, %v1033, %v1035
  %v1047 = vsel %vm264, %v1035, %v1037
  %v1048 = vsel %vm264, %v1037, %v1039
  %v1049 = vsel %vm264, %v1039, %v1041
  %v1050 = vsel %vm264, %v1041, %v1043
  %v1051 = vsel %vm264, %v1043, %v1045
  %1058 = vst [vmem:[#allocation4 + $0xf0] sm:$0xff] %v1046
  %1059 = vst [vmem:[#allocation4 + $0xf8] sm:$0xff] %v1047
  %1060 = vst [vmem:[#allocation4 + $0x100] sm:$0xff] %v1048
  %1061 = vst [vmem:[#allocation4 + $0x108] sm:$0xff] %v1049
  %1062 = vst [vmem:[#allocation4 + $0x110] sm:$0xff] %v1050
  %1063 = vst [vmem:[#allocation4 + $0x118] sm:$0xff] %v1051
  %v1064 = vld [vmem:[#allocation2 + $0x8] sm:$0xff]
  %v1065 = vld [vmem:[#allocation2 + $0x10] sm:$0xff]
  %v1066 = vld [vmem:[#allocation2 + $0x18] sm:$0xff]
  %v1067 = vld [vmem:[#allocation2 + $0x20] sm:$0xff]
  %v1068 = vld [vmem:[#allocation2 + $0x28] sm:$0xff]
  %v1069 = vld [vmem:[#allocation2 + $0x30] sm:$0xff]
  %v1070 = vld [vmem:[#allocation2 + $0x38] sm:$0xff]
  %1078 = vrot.lane.b32.xlu0 %v1064, 111
  %v1079 = vpop.permute.xlu0 %1078
  %1080 = vrot.lane.b32.xlu0 %v1065, 111
  %v1081 = vpop.permute.xlu0 %1080
  %1082 = vrot.lane.b32.xlu0 %v1066, 111
  %v1083 = vpop.permute.xlu0 %1082
  %1084 = vrot.lane.b32.xlu0 %v1067, 111
  %v1085 = vpop.permute.xlu0 %1084
  %1086 = vrot.lane.b32.xlu0 %v1068, 111
  %v1087 = vpop.permute.xlu0 %1086
  %1088 = vrot.lane.b32.xlu0 %v1069, 111
  %v1089 = vpop.permute.xlu0 %1088
  %1090 = vrot.lane.b32.xlu0 %v1070, 111
  %v1091 = vpop.permute.xlu0 %1090
  %v1092 = vsel %vm311, %v1079, %v1081
  %v1093 = vsel %vm311, %v1081, %v1083
  %v1094 = vsel %vm311, %v1083, %v1085
  %v1095 = vsel %vm311, %v1085, %v1087
  %v1096 = vsel %vm311, %v1087, %v1089
  %v1097 = vsel %vm311, %v1089, %v1091
  %1104 = vst [vmem:[#allocation4 + $0x120] sm:$0xff] %v1092
  %1105 = vst [vmem:[#allocation4 + $0x128] sm:$0xff] %v1093
  %1106 = vst [vmem:[#allocation4 + $0x130] sm:$0xff] %v1094
  %1107 = vst [vmem:[#allocation4 + $0x138] sm:$0xff] %v1095
  %1108 = vst [vmem:[#allocation4 + $0x140] sm:$0xff] %v1096
  %1109 = vst [vmem:[#allocation4 + $0x148] sm:$0xff] %v1097
  %v1110 = vld [vmem:[#allocation2 + $0x8] sm:$0xff]
  %v1111 = vld [vmem:[#allocation2 + $0x10] sm:$0xff]
  %v1112 = vld [vmem:[#allocation2 + $0x18] sm:$0xff]
  %v1113 = vld [vmem:[#allocation2 + $0x20] sm:$0xff]
  %v1114 = vld [vmem:[#allocation2 + $0x28] sm:$0xff]
  %v1115 = vld [vmem:[#allocation2 + $0x30] sm:$0xff]
  %v1116 = vld [vmem:[#allocation2 + $0x38] sm:$0xff]
  %1124 = vrot.lane.b32.xlu0 %v1110, 110
  %v1125 = vpop.permute.xlu0 %1124
  %1126 = vrot.lane.b32.xlu0 %v1111, 110
  %v1127 = vpop.permute.xlu0 %1126
  %1128 = vrot.lane.b32.xlu0 %v1112, 110
  %v1129 = vpop.permute.xlu0 %1128
  %1130 = vrot.lane.b32.xlu0 %v1113, 110
  %v1131 = vpop.permute.xlu0 %1130
  %1132 = vrot.lane.b32.xlu0 %v1114, 110
  %v1133 = vpop.permute.xlu0 %1132
  %1134 = vrot.lane.b32.xlu0 %v1115, 110
  %v1135 = vpop.permute.xlu0 %1134
  %1136 = vrot.lane.b32.xlu0 %v1116, 110
  %v1137 = vpop.permute.xlu0 %1136
  %v1138 = vsel %vm358, %v1125, %v1127
  %v1139 = vsel %vm358, %v1127, %v1129
  %v1140 = vsel %vm358, %v1129, %v1131
  %v1141 = vsel %vm358, %v1131, %v1133
  %v1142 = vsel %vm358, %v1133, %v1135
  %v1143 = vsel %vm358, %v1135, %v1137
  %1150 = vst [vmem:[#allocation4 + $0x150] sm:$0xff] %v1138
  %1151 = vst [vmem:[#allocation4 + $0x158] sm:$0xff] %v1139
  %1152 = vst [vmem:[#allocation4 + $0x160] sm:$0xff] %v1140
  %1153 = vst [vmem:[#allocation4 + $0x168] sm:$0xff] %v1141
  %1154 = vst [vmem:[#allocation4 + $0x170] sm:$0xff] %v1142
  %1155 = vst [vmem:[#allocation4 + $0x178] sm:$0xff] %v1143
  %v1156 = vld [vmem:[#allocation2 + $0x8] sm:$0xff]
  %v1157 = vld [vmem:[#allocation2 + $0x10] sm:$0xff]
  %v1158 = vld [vmem:[#allocation2 + $0x18] sm:$0xff]
  %v1159 = vld [vmem:[#allocation2 + $0x20] sm:$0xff]
  %v1160 = vld [vmem:[#allocation2 + $0x28] sm:$0xff]
  %v1161 = vld [vmem:[#allocation2 + $0x30] sm:$0xff]
  %v1162 = vld [vmem:[#allocation2 + $0x38] sm:$0xff]
  %1170 = vrot.lane.b32.xlu0 %v1156, 109
  %v1171 = vpop.permute.xlu0 %1170
  %1172 = vrot.lane.b32.xlu0 %v1157, 109
  %v1173 = vpop.permute.xlu0 %1172
  %1174 = vrot.lane.b32.xlu0 %v1158, 109
  %v1175 = vpop.permute.xlu0 %1174
  %1176 = vrot.lane.b32.xlu0 %v1159, 109
  %v1177 = vpop.permute.xlu0 %1176
  %1178 = vrot.lane.b32.xlu0 %v1160, 109
  %v1179 = vpop.permute.xlu0 %1178
  %1180 = vrot.lane.b32.xlu0 %v1161, 109
  %v1181 = vpop.permute.xlu0 %1180
  %1182 = vrot.lane.b32.xlu0 %v1162, 109
  %v1183 = vpop.permute.xlu0 %1182
  %v1184 = vsel %vm405, %v1171, %v1173
  %v1185 = vsel %vm405, %v1173, %v1175
  %v1186 = vsel %vm405, %v1175, %v1177
  %v1187 = vsel %vm405, %v1177, %v1179
  %v1188 = vsel %vm405, %v1179, %v1181
  %v1189 = vsel %vm405, %v1181, %v1183
  %1196 = vst [vmem:[#allocation4 + $0x180] sm:$0xff] %v1184
  %1197 = vst [vmem:[#allocation4 + $0x188] sm:$0xff] %v1185
  %1198 = vst [vmem:[#allocation4 + $0x190] sm:$0xff] %v1186
  %1199 = vst [vmem:[#allocation4 + $0x198] sm:$0xff] %v1187
  %1200 = vst [vmem:[#allocation4 + $0x1a0] sm:$0xff] %v1188
  %1201 = vst [vmem:[#allocation4 + $0x1a8] sm:$0xff] %v1189
  %v1202 = vld [vmem:[%s6] sm:$0xff]
  %v1203 = vld [vmem:[#allocation4] sm:$0xff]
  %v1204 = vld [vmem:[#allocation4 + $0x8] sm:$0xff]
  %v1205 = vld [vmem:[#allocation4 + $0x10] sm:$0xff]
  %v1206 = vld [vmem:[#allocation4 + $0x18] sm:$0xff]
  %v1207 = vld [vmem:[#allocation4 + $0x20] sm:$0xff]
  %v1208 = vld [vmem:[#allocation4 + $0x28] sm:$0xff]
  %v1209 = vld [vmem:[#allocation4 + $0x30] sm:$0xff]
  %v1210 = vld [vmem:[#allocation4 + $0x38] sm:$0xff]
  %v1211 = vld [vmem:[#allocation4 + $0x40] sm:$0xff]
  %v1212 = vld [vmem:[#allocation4 + $0x48] sm:$0xff]
  %v1213 = vld [vmem:[#allocation4 + $0x50] sm:$0xff]
  %v1214 = vld [vmem:[#allocation4 + $0x58] sm:$0xff]
  %v1215 = vld [vmem:[#allocation4 + $0x60] sm:$0xff]
  %v1216 = vld [vmem:[#allocation4 + $0x68] sm:$0xff]
  %v1217 = vld [vmem:[#allocation4 + $0x70] sm:$0xff]
  %v1218 = vld [vmem:[#allocation4 + $0x78] sm:$0xff]
  %v1219 = vld [vmem:[#allocation4 + $0x80] sm:$0xff]
  %v1220 = vld [vmem:[#allocation4 + $0x88] sm:$0xff]
  %v1221 = vld [vmem:[#allocation4 + $0x90] sm:$0xff]
  %v1222 = vld [vmem:[#allocation4 + $0x98] sm:$0xff]
  %v1223 = vld [vmem:[#allocation4 + $0xa0] sm:$0xff]
  %v1224 = vld [vmem:[#allocation4 + $0xa8] sm:$0xff]
  %v1225 = vld [vmem:[#allocation4 + $0xb0] sm:$0xff]
  %v1226 = vld [vmem:[#allocation4 + $0xb8] sm:$0xff]
  %v1227 = vld [vmem:[#allocation4 + $0xc0] sm:$0xff]
  %v1228 = vld [vmem:[#allocation4 + $0xc8] sm:$0xff]
  %v1229 = vld [vmem:[#allocation4 + $0xd0] sm:$0xff]
  %v1230 = vld [vmem:[#allocation4 + $0xd8] sm:$0xff]
  %v1231 = vld [vmem:[#allocation4 + $0xe0] sm:$0xff]
  %v1232 = vld [vmem:[#allocation4 + $0xe8] sm:$0xff]
  %v1233 = vld [vmem:[#allocation4 + $0xf0] sm:$0xff]
  %v1234 = vld [vmem:[#allocation4 + $0xf8] sm:$0xff]
  %v1235 = vld [vmem:[#allocation4 + $0x100] sm:$0xff]
  %v1236 = vld [vmem:[#allocation4 + $0x108] sm:$0xff]
  %v1237 = vld [vmem:[#allocation4 + $0x110] sm:$0xff]
  %v1238 = vld [vmem:[#allocation4 + $0x118] sm:$0xff]
  %v1239 = vld [vmem:[#allocation4 + $0x120] sm:$0xff]
  %v1240 = vld [vmem:[#allocation4 + $0x128] sm:$0xff]
  %v1241 = vld [vmem:[#allocation4 + $0x130] sm:$0xff]
  %v1242 = vld [vmem:[#allocation4 + $0x138] sm:$0xff]
  %v1243 = vld [vmem:[#allocation4 + $0x140] sm:$0xff]
  %v1244 = vld [vmem:[#allocation4 + $0x148] sm:$0xff]
  %v1245 = vld [vmem:[#allocation4 + $0x150] sm:$0xff]
  %v1246 = vld [vmem:[#allocation4 + $0x158] sm:$0xff]
  %v1247 = vld [vmem:[#allocation4 + $0x160] sm:$0xff]
  %v1248 = vld [vmem:[#allocation4 + $0x168] sm:$0xff]
  %v1249 = vld [vmem:[#allocation4 + $0x170] sm:$0xff]
  %v1250 = vld [vmem:[#allocation4 + $0x178] sm:$0xff]
  %v1251 = vld [vmem:[#allocation4 + $0x180] sm:$0xff]
  %v1252 = vld [vmem:[#allocation4 + $0x188] sm:$0xff]
  %v1253 = vld [vmem:[#allocation4 + $0x190] sm:$0xff]
  %v1254 = vld [vmem:[#allocation4 + $0x198] sm:$0xff]
  %v1255 = vld [vmem:[#allocation4 + $0x1a0] sm:$0xff]
  %v1256 = vld [vmem:[#allocation4 + $0x1a8] sm:$0xff]
  %v1257 = vld [vmem:[%s7] sm:$0xff]
  %1259 = vset.pattern.permute.xlu0 0
  %1260 = vperm.xlu0 %1259, %v1257
  %v1261 = vpop.permute.xlu0 %1260
  %v1264 = vsel %vm485, %v1202, 0
  %1266 = vmatprep.subr.mxu0 %v1204
  %1267 = vmatpush1.msra.mxu0 %v1203
  %1268 = vmatprep.subr.mxu0 %v1210
  %1269 = vmatpush1.msra.mxu0 %v1209
  %1270 = vmatprep.subr.mxu0 %v1216
  %1271 = vmatpush1.msra.mxu0 %v1215
  %1272 = vmatprep.subr.mxu0 %v1222
  %1273 = vmatpush1.msra.mxu0 %v1221
  %1274 = vmatprep.subr.mxu0 %v1228
  %1275 = vmatpush1.msra.mxu0 %v1227
  %1276 = vmatprep.subr.mxu0 %v1234
  %1277 = vmatpush1.msra.mxu0 %v1233
  %1278 = vmatprep.subr.mxu0 %v1240
  %1279 = vmatpush1.msra.mxu0 %v1239
  %1280 = vmatprep.subr.mxu0 %v1246
  %1281 = vmatpush1.msra.mxu0 %v1245
  %1282 = vmatprep.subr.mxu0 %v1252
  %1283 = vmatpush1.msra.mxu0 %v1251
  %1284 = vmatprep.subr.mxu0 0.0
  %1285 = vmatpush1.msra.mxu0 0.0
  %1286 = vmatprep.subr.mxu0 0.0
  %1287 = vmatpush1.msra.mxu0 0.0
  %1288 = vmatprep.subr.mxu0 0.0
  %1289 = vmatpush1.msra.mxu0 0.0
  %1290 = vmatprep.subr.mxu0 0.0
  %1291 = vmatpush1.msra.mxu0 0.0
  %1292 = vmatprep.subr.mxu0 0.0
  %1293 = vmatpush1.msra.mxu0 0.0
  %1294 = vmatprep.subr.mxu0 0.0
  %1295 = vmatpush1.msra.mxu0 0.0
  %1296 = vmatprep.subr.mxu0 0.0
  %1297 = vmatpush1.msra.mxu0 0.0
  %1298 = vmatprep.subr.mxu0 0.0
  %1299 = vmatpush1.msra.mxu0 0.0
  %1300 = vmatprep.subr.mxu0 0.0
  %1301 = vmatpush1.msra.mxu0 0.0
  %1302 = vmatprep.subr.mxu0 0.0
  %1303 = vmatpush1.msra.mxu0 0.0
  %1304 = vmatprep.subr.mxu0 0.0
  %1305 = vmatpush1.msra.mxu0 0.0
  %1306 = vmatprep.subr.mxu0 0.0
  %1307 = vmatpush1.msra.mxu0 0.0
  %1308 = vmatprep.subr.mxu0 0.0
  %1309 = vmatpush1.msra.mxu0 0.0
  %1310 = vmatprep.subr.mxu0 0.0
  %1311 = vmatpush1.msra.mxu0 0.0
  %1312 = vmatprep.subr.mxu0 0.0
  %1313 = vmatpush1.msra.mxu0 0.0
  %1314 = vmatprep.subr.mxu0 0.0
  %1315 = vmatpush1.msra.mxu0 0.0
  %1316 = vmatprep.subr.mxu0 0.0
  %1317 = vmatpush1.msra.mxu0 0.0
  %1318 = vmatprep.subr.mxu0 0.0
  %1319 = vmatpush1.msra.mxu0 0.0
  %1320 = vmatprep.subr.mxu0 0.0
  %1321 = vmatpush1.msra.mxu0 0.0
  %1322 = vmatprep.subr.mxu0 0.0
  %1323 = vmatpush1.msra.mxu0 0.0
  %1324 = vmatprep.subr.mxu0 0.0
  %1325 = vmatpush1.msra.mxu0 0.0
  %1326 = vmatprep.subr.mxu0 0.0
  %1327 = vmatpush1.msra.mxu0 0.0
  %1328 = vmatprep.subr.mxu0 0.0
  %1329 = vmatpush1.msra.mxu0 0.0
  %1330 = vmatprep.mubr.f32.mxu0 0.0
  %1331 = vmatmul.mubr.f32.gmra.mrb[0].mxu0 %v1264
  %v1332 = vpop.f32.mrb[0].mxu0
  %v1333 = vadd.f32 %v1261, %v1332
  %v1334 = vpop.f32.mrb[0].mxu0
  %v1335 = vadd.f32 %v1261, %v1334
  %1336 = vdwg.mxu0
  %1337 = vmatprep.subr.mxu0 %v1206
  %1338 = vmatpush1.msra.mxu0 %v1205
  %1339 = vmatprep.subr.mxu0 %v1212
  %1340 = vmatpush1.msra.mxu0 %v1211
  %1341 = vmatprep.subr.mxu0 %v1218
  %1342 = vmatpush1.msra.mxu0 %v1217
  %1343 = vmatprep.subr.mxu0 %v1224
  %1344 = vmatpush1.msra.mxu0 %v1223
  %1345 = vmatprep.subr.mxu0 %v1230
  %1346 = vmatpush1.msra.mxu0 %v1229
  %1347 = vmatprep.subr.mxu0 %v1236
  %1348 = vmatpush1.msra.mxu0 %v1235
  %1349 = vmatprep.subr.mxu0 %v1242
  %1350 = vmatpush1.msra.mxu0 %v1241
  %1351 = vmatprep.subr.mxu0 %v1248
  %1352 = vmatpush1.msra.mxu0 %v1247
  %1353 = vmatprep.subr.mxu0 %v1254
  %1354 = vmatpush1.msra.mxu0 %v1253
  %1355 = vmatprep.subr.mxu0 0.0
  %1356 = vmatpush1.msra.mxu0 0.0
  %1357 = vmatprep.subr.mxu0 0.0
  %1358 = vmatpush1.msra.mxu0 0.0
  %1359 = vmatprep.subr.mxu0 0.0
  %1360 = vmatpush1.msra.mxu0 0.0
  %1361 = vmatprep.subr.mxu0 0.0
  %1362 = vmatpush1.msra.mxu0 0.0
  %1363 = vmatprep.subr.mxu0 0.0
  %1364 = vmatpush1.msra.mxu0 0.0
  %1365 = vmatprep.subr.mxu0 0.0
  %1366 = vmatpush1.msra.mxu0 0.0
  %1367 = vmatprep.subr.mxu0 0.0
  %1368 = vmatpush1.msra.mxu0 0.0
  %1369 = vmatprep.subr.mxu0 0.0
  %1370 = vmatpush1.msra.mxu0 0.0
  %1371 = vmatprep.subr.mxu0 0.0
  %1372 = vmatpush1.msra.mxu0 0.0
  %1373 = vmatprep.subr.mxu0 0.0
  %1374 = vmatpush1.msra.mxu0 0.0
  %1375 = vmatprep.subr.mxu0 0.0
  %1376 = vmatpush1.msra.mxu0 0.0
  %1377 = vmatprep.subr.mxu0 0.0
  %1378 = vmatpush1.msra.mxu0 0.0
  %1379 = vmatprep.subr.mxu0 0.0
  %1380 = vmatpush1.msra.mxu0 0.0
  %1381 = vmatprep.subr.mxu0 0.0
  %1382 = vmatpush1.msra.mxu0 0.0
  %1383 = vmatprep.subr.mxu0 0.0
  %1384 = vmatpush1.msra.mxu0 0.0
  %1385 = vmatprep.subr.mxu0 0.0
  %1386 = vmatpush1.msra.mxu0 0.0
  %1387 = vmatprep.subr.mxu0 0.0
  %1388 = vmatpush1.msra.mxu0 0.0
  %1389 = vmatprep.subr.mxu0 0.0
  %1390 = vmatpush1.msra.mxu0 0.0
  %1391 = vmatprep.subr.mxu0 0.0
  %1392 = vmatpush1.msra.mxu0 0.0
  %1393 = vmatprep.subr.mxu0 0.0
  %1394 = vmatpush1.msra.mxu0 0.0
  %1395 = vmatprep.subr.mxu0 0.0
  %1396 = vmatpush1.msra.mxu0 0.0
  %1397 = vmatprep.subr.mxu0 0.0
  %1398 = vmatpush1.msra.mxu0 0.0
  %1399 = vmatprep.subr.mxu0 0.0
  %1400 = vmatpush1.msra.mxu0 0.0
  %1401 = vmatprep.mubr.f32.mxu0 0.0
  %1402 = vmatmul.mubr.f32.gmra.mrb[0].mxu0 %v1264
  %v1403 = vpop.f32.mrb[0].mxu0
  %v1404 = vadd.f32 %v1261, %v1403
  %v1405 = vpop.f32.mrb[0].mxu0
  %v1406 = vadd.f32 %v1261, %v1405
  %1407 = vdwg.mxu0
  %1408 = vmatprep.subr.mxu0 %v1208
  %1409 = vmatpush1.msra.mxu0 %v1207
  %1410 = vmatprep.subr.mxu0 %v1214
  %1411 = vmatpush1.msra.mxu0 %v1213
  %1412 = vmatprep.subr.mxu0 %v1220
  %1413 = vmatpush1.msra.mxu0 %v1219
  %1414 = vmatprep.subr.mxu0 %v1226
  %1415 = vmatpush1.msra.mxu0 %v1225
  %1416 = vmatprep.subr.mxu0 %v1232
  %1417 = vmatpush1.msra.mxu0 %v1231
  %1418 = vmatprep.subr.mxu0 %v1238
  %1419 = vmatpush1.msra.mxu0 %v1237
  %1420 = vmatprep.subr.mxu0 %v1244
  %1421 = vmatpush1.msra.mxu0 %v1243
  %1422 = vmatprep.subr.mxu0 %v1250
  %1423 = vmatpush1.msra.mxu0 %v1249
  %1424 = vmatprep.subr.mxu0 %v1256
  %1425 = vmatpush1.msra.mxu0 %v1255
  %1426 = vmatprep.subr.mxu0 0.0
  %1427 = vmatpush1.msra.mxu0 0.0
  %1428 = vmatprep.subr.mxu0 0.0
  %1429 = vmatpush1.msra.mxu0 0.0
  %1430 = vmatprep.subr.mxu0 0.0
  %1431 = vmatpush1.msra.mxu0 0.0
  %1432 = vmatprep.subr.mxu0 0.0
  %1433 = vmatpush1.msra.mxu0 0.0
  %1434 = vmatprep.subr.mxu0 0.0
  %1435 = vmatpush1.msra.mxu0 0.0
  %1436 = vmatprep.subr.mxu0 0.0
  %1437 = vmatpush1.msra.mxu0 0.0
  %1438 = vmatprep.subr.mxu0 0.0
  %1439 = vmatpush1.msra.mxu0 0.0
  %1440 = vmatprep.subr.mxu0 0.0
  %1441 = vmatpush1.msra.mxu0 0.0
  %1442 = vmatprep.subr.mxu0 0.0
  %1443 = vmatpush1.msra.mxu0 0.0
  %1444 = vmatprep.subr.mxu0 0.0
  %1445 = vmatpush1.msra.mxu0 0.0
  %1446 = vmatprep.subr.mxu0 0.0
  %1447 = vmatpush1.msra.mxu0 0.0
  %1448 = vmatprep.subr.mxu0 0.0
  %1449 = vmatpush1.msra.mxu0 0.0
  %1450 = vmatprep.subr.mxu0 0.0
  %1451 = vmatpush1.msra.mxu0 0.0
  %1452 = vmatprep.subr.mxu0 0.0
  %1453 = vmatpush1.msra.mxu0 0.0
  %1454 = vmatprep.subr.mxu0 0.0
  %1455 = vmatpush1.msra.mxu0 0.0
  %1456 = vmatprep.subr.mxu0 0.0
  %1457 = vmatpush1.msra.mxu0 0.0
  %1458 = vmatprep.subr.mxu0 0.0
  %1459 = vmatpush1.msra.mxu0 0.0
  %1460 = vmatprep.subr.mxu0 0.0
  %1461 = vmatpush1.msra.mxu0 0.0
  %1462 = vmatprep.subr.mxu0 0.0
  %1463 = vmatpush1.msra.mxu0 0.0
  %1464 = vmatprep.subr.mxu0 0.0
  %1465 = vmatpush1.msra.mxu0 0.0
  %1466 = vmatprep.subr.mxu0 0.0
  %1467 = vmatpush1.msra.mxu0 0.0
  %1468 = vmatprep.subr.mxu0 0.0
  %1469 = vmatpush1.msra.mxu0 0.0
  %1470 = vmatprep.subr.mxu0 0.0
  %1471 = vmatpush1.msra.mxu0 0.0
  %1472 = vmatprep.mubr.f32.mxu0 0.0
  %1473 = vmatmul.mubr.f32.gmra.mrb[0].mxu0 %v1264
  %v1474 = vpop.f32.mrb[0].mxu0
  %v1475 = vadd.f32 %v1261, %v1474
  %v1476 = vpop.f32.mrb[0].mxu0
  %v1477 = vadd.f32 %v1261, %v1476
  %1478 = vdwg.mxu0
  %v1479 = vmul.f32 %v1333, %v706
  %v1480 = vmul.f32 %v1335, %v710
  %v1481 = vmul.f32 %v1404, %v714
  %v1482 = vmul.f32 %v1406, %v718
  %v1483 = vmul.f32 %v1475, %v722
  %v1484 = vmul.f32 %v1477, %v726
  %v1485 = vadd.f32 %v1479, %v1480
  %v1486 = vadd.f32 %v1485, %v1481
  %v1487 = vadd.f32 %v1486, %v1482
  %v1488 = vadd.f32 %v1487, %v1483
  %v1489 = vadd.f32 %v1488, %v1484
  %1490 = vadd.xlane.f32.xlu0 %v1489
  %v1491 = vpop.xlane.xlu0 %1490
  %v1492 = vmul.f32 %v1491, 0.001953125
  %v1493 = vsub.f32 %v1333, %v1492
  %v1494 = vsub.f32 %v1335, %v1492
  %v1495 = vsub.f32 %v1404, %v1492
  %v1496 = vsub.f32 %v1406, %v1492
  %v1497 = vsub.f32 %v1475, %v1492
  %v1498 = vsub.f32 %v1477, %v1492
  %v1499 = vmul.f32 %v1493, %v706
  %v1500 = vmul.f32 %v1494, %v710
  %v1501 = vmul.f32 %v1495, %v714
  %v1502 = vmul.f32 %v1496, %v718
  %v1503 = vmul.f32 %v1497, %v722
  %v1504 = vmul.f32 %v1498, %v726
  %v1505 = vmul.f32 %v1499, %v1499
  %v1506 = vmul.f32 %v1500, %v1500
  %v1507 = vmul.f32 %v1501, %v1501
  %v1508 = vmul.f32 %v1502, %v1502
  %v1509 = vmul.f32 %v1503, %v1503
  %v1510 = vmul.f32 %v1504, %v1504
  %v1511 = vadd.f32 %v1505, %v1506
  %v1512 = vadd.f32 %v1511, %v1507
  %v1513 = vadd.f32 %v1512, %v1508
  %v1514 = vadd.f32 %v1513, %v1509
  %v1515 = vadd.f32 %v1514, %v1510
  %1516 = vadd.xlane.f32.xlu0 %v1515
  %v1517 = vpop.xlane.xlu0 %1516
  %v1518 = vmul.f32 %v1517, 0.001953125
  %v1519 = vld [vmem:[%s8] sm:$0xff]
  %v1520 = vadd.f32 %v1518, 1e-05
  %v1521 = vrsqrt.pop %v1520
  %v1522 = vmul.f32 %v1519, %v1521
  %v1523 = vld [vmem:[%s9] sm:$0xff]
  %v1524 = vmul.f32 %v1492, %v1522
  %v1525 = vsub.f32 %v1523, %v1524
  %1527 = vset.pattern.permute.xlu0 0
  %1528 = vperm.xlu0 %1527, %v1522
  %v1529 = vpop.permute.xlu0 %1528
  %v1531 = vmul.f32 %v1333, %v1529
  %v1532 = vmul.f32 %v1335, %v1529
  %v1533 = vmul.f32 %v1404, %v1529
  %v1534 = vmul.f32 %v1406, %v1529
  %v1535 = vmul.f32 %v1475, %v1529
  %v1536 = vmul.f32 %v1477, %v1529
  %1538 = vset.pattern.permute.xlu0 0
  %1539 = vperm.xlu0 %1538, %v1525
  %v1540 = vpop.permute.xlu0 %1539
  %v1542 = vadd.f32 %v1531, %v1540
  %v1543 = vadd.f32 %v1532, %v1540
  %v1544 = vadd.f32 %v1533, %v1540
  %v1545 = vadd.f32 %v1534, %v1540
  %v1546 = vadd.f32 %v1535, %v1540
  %v1547 = vadd.f32 %v1536, %v1540
  %v1548 = vmax.f32 %v1542, 0.0
  %v1549 = vmax.f32 %v1543, 0.0
  %v1550 = vmax.f32 %v1544, 0.0
  %v1551 = vmax.f32 %v1545, 0.0
  %v1552 = vmax.f32 %v1546, 0.0
  %v1553 = vmax.f32 %v1547, 0.0
  %1554 = vst [vmem:[%s10] sm:$0xff] %v1548
  %1555 = vst [vmem:[%s10 + $0x8] sm:$0xff] %v1549
  %1556 = vst [vmem:[%s10 + $0x10] sm:$0xff] %v1550
  %1557 = vst [vmem:[%s10 + $0x18] sm:$0xff] %v1551
  %1558 = vst [vmem:[%s10 + $0x20] sm:$0xff] %v1552
  %1559 = vst [vmem:[%s10 + $0x28] sm:$0xff] %v1553
  // Predicated region
  $region42: #{double_ds_conv.1} parent=0 // pred_check
    _
  $region43: #{double_ds_conv.1} parent=0 // pred_check_branch
    %1561 = sbr.rel (0) target = $region45
  $region44: #{double_ds_conv.1} parent=0 // pred_region
    _
  $region45: #{double_ds_conv.1} parent=0 // pred_fallthru
    _
  // Predicated region
  $region46: #{double_ds_conv.1} parent=0 // pred_check
    _
  $region47: #{double_ds_conv.1} parent=0 // pred_check_branch
    %1563 = sbr.rel (0) target = $region49
  $region48: #{double_ds_conv.1} parent=0 // pred_region
    _
  $region49: #{double_ds_conv.1} parent=0 // pred_fallthru
    _

</llo_original>
